<compile_context>
chip_gen: v7x
topology: tpu7x:2x2x1
jax: 0.10.0
libtpu: 0.0.40
codegen_flags: <defaults>
</compile_context>

<pallas_src>
import jax
import jax.numpy as jnp
from jax.experimental import pallas as pl
from jax.experimental.pallas import tpu as pltpu


def _round_up(x, m):
    return (x + m - 1) // m * m


def _pick_tk(hidden, tk_max):
    """Largest multiple of 128 <= tk_max that evenly divides `hidden`."""
    for cand in (512, 448, 384, 320, 256, 192, 128):
        if cand <= tk_max and cand < hidden and hidden % cand == 0:
            return cand
    return hidden


def prepare_head_params(dense_w, dense_b, out_w, out_b, *,
                        param_dtype=jnp.bfloat16):
    """One-time parameter preparation (call at model init, NOT per forward).

    dense_w: [H, H]  ([in, out], i.e. PyTorch dense.weight.T)
    dense_b: [H]
    out_w:   [H, L]  ([in, out], i.e. PyTorch out_proj.weight.T)
    out_b:   [L]
    """
    H = dense_w.shape[0]
    L = out_w.shape[1]
    L_pad = _round_up(L, 128)
    if L_pad != L:  # lane-dense logits -> unmasked full-lane vst in the kernel
        out_w = jnp.pad(out_w, ((0, 0), (0, L_pad - L)))
        out_b = jnp.pad(out_b, ((0, L_pad - L),))
    return {
        "w1": dense_w.astype(param_dtype),                  # [H, H]
        "b1": dense_b.astype(jnp.float32).reshape(1, H),    # f32 row
        "w2": out_w.astype(param_dtype),                    # [H, L_pad]
        "b2": out_b.astype(jnp.float32).reshape(1, L_pad),  # f32 row
        "num_labels": L,
    }


def _head_kernel(x_ref, w1_ref, b1_ref, w2_ref, b2_ref, o_ref, acc_ref):
    k = pl.program_id(1)

    # Partial dense matmul for this K chunk: [TB, TK] @ [TK, H], f32 MXU acc.
    # Activation cast to the weight dtype happens here on the VPU (free).
    partial = jnp.dot(x_ref[...].astype(w1_ref.dtype), w1_ref[...],
                      preferred_element_type=jnp.float32)

    @pl.when(k == 0)
    def _():
        acc_ref[...] = partial

    @pl.when(k > 0)
    def _():
        acc_ref[...] += partial

    # Epilogue on the last K chunk: bias + tanh (EUP) + out_proj + bias.
    @pl.when(k == pl.num_programs(1) - 1)
    def _():
        h = jnp.tanh(acc_ref[...] + b1_ref[...])
        out = jnp.dot(h.astype(w2_ref.dtype), w2_ref[...],
                      preferred_element_type=jnp.float32)
        o_ref[...] = (out + b2_ref[...]).astype(o_ref.dtype)


def wav2vec2_classification_head(features, params, *, tb=None, tk=512):
    """features: [B, H]; params from prepare_head_params. Returns [B, L]."""
    w1, b1, w2, b2 = params["w1"], params["b1"], params["w2"], params["b2"]
    L = params["num_labels"]
    B, H = features.shape
    assert w1.shape == (H, H)
    L_pad = w2.shape[1]
    out_dtype = features.dtype

    # ---- batch tiling (no pad copy: ragged last tile is masked by Pallas) --
    if tb is None:
        tb = 512 if B >= 2048 else 256
    TB = min(tb, _round_up(B, 8))
    nb = pl.cdiv(B, TB)

    # ---- K (contraction) tiling of the dense weight -------------------------
    # One batch tile  -> stream W1 in K chunks (hide the initial weight DMA).
    # Many batch tiles -> keep W1 fully resident so it is fetched only once.
    TK = _pick_tk(H, tk) if nb == 1 else H
    nk = H // TK

    # ---- VMEM budget ---------------------------------------------------------
    x_it = features.dtype.itemsize
    p_it = w1.dtype.itemsize
    o_it = jnp.dtype(out_dtype).itemsize
    w1_bufs = 1 if nk == 1 else 2
    vmem_needed = (
        2 * TB * TK * x_it                 # activation tiles (double-buffered)
        + w1_bufs * TK * H * p_it          # dense weight (chunked or resident)
        + H * L_pad * p_it                 # out_proj weight (single-buffered)
        + (H + L_pad) * 4                  # biases
        + 2 * TB * L_pad * o_it            # output tiles
        + TB * H * 4                       # f32 accumulator scratch
    )
    vmem_limit = min(max(int(1.25 * vmem_needed) + (2 << 20), 32 << 20), 48 << 20)

    # Constant-index operands never change block -> single buffer is enough.
    resident = dict(pipeline_mode=pl.Buffered(1))
    if nk == 1:
        w1_spec = pl.BlockSpec((TK, H), lambda i, k: (0, 0), **resident)
    else:
        w1_spec = pl.BlockSpec((TK, H), lambda i, k: (k, 0))

    # Megacore (v7x): only split the batch axis when there is enough
    # activation work to pay for duplicating the weight DMA on both cores.
    batch_sem = "parallel" if nb > 4 else "arbitrary"

    cost = pl.CostEstimate(
        flops=2 * B * H * (H + L_pad),
        transcendentals=B * H,
        bytes_accessed=(features.size * x_it
                        + w1.size * p_it + w2.size * p_it
                        + b1.size * 4 + b2.size * 4
                        + B * L_pad * o_it),
    )

    logits = pl.pallas_call(
        _head_kernel,
        out_shape=jax.ShapeDtypeStruct((B, L_pad), out_dtype),
        grid_spec=pltpu.PrefetchScalarGridSpec(
            num_scalar_prefetch=0,
            grid=(nb, nk),
            in_specs=[
                pl.BlockSpec((TB, TK), lambda i, k: (i, k)),                 # x
                w1_spec,                                                     # dense W
                pl.BlockSpec((1, H), lambda i, k: (0, 0), **resident),       # dense b
                pl.BlockSpec((H, L_pad), lambda i, k: (0, 0), **resident),   # out_proj W
                pl.BlockSpec((1, L_pad), lambda i, k: (0, 0), **resident),   # out_proj b
            ],
            out_specs=pl.BlockSpec((TB, L_pad), lambda i, k: (i, 0)),
            scratch_shapes=[pltpu.VMEM((TB, H), jnp.float32)],
        ),
        compiler_params=pltpu.CompilerParams(
            dimension_semantics=(batch_sem, "arbitrary"),
            vmem_limit_bytes=vmem_limit),
        cost_estimate=cost,
    )(features, w1, b1, w2, b2)

    # Strip label padding (tiny copy; batch needed no padding at all).
    return logits[:, :L] if L_pad != L else logits


if __name__ == "__main__":
    # Use a high-precision f32 reference so comparisons measure kernel error,
    # not XLA's default (reduced-precision) matmul on TPU.
    jax.config.update("jax_default_matmul_precision", "highest")

    key = jax.random.PRNGKey(0)

    def make_inputs(B, H, L, k):
        k_x, k_w1, k_b1, k_w2, k_b2 = jax.random.split(k, 5)
        features = jax.random.normal(k_x, (B, H), dtype=jnp.float32)
        dense_w = jax.random.normal(k_w1, (H, H), dtype=jnp.float32) * 0.05
        dense_b = jax.random.normal(k_b1, (H,), dtype=jnp.float32) * 0.05
        out_w = jax.random.normal(k_w2, (H, L), dtype=jnp.float32) * 0.05
        out_b = jax.random.normal(k_b2, (L,), dtype=jnp.float32) * 0.05
        return features, dense_w, dense_b, out_w, out_b

    def reference(x, w1, b1, w2, b2):
        return jnp.tanh(x @ w1 + b1) @ w2 + b2

    k1, k2 = jax.random.split(key)

    # --- 1) module-consistent small shapes, f32 params, 2 batch tiles -------
    B, H, L = 64, 32, 4
    x, w1, b1, w2, b2 = make_inputs(B, H, L, k1)
    ref = reference(x, w1, b1, w2, b2)
    params_f32 = prepare_head_params(w1, b1, w2, b2, param_dtype=jnp.float32)
    out = jax.block_until_ready(
        wav2vec2_classification_head(x, params_f32, tb=32))
    assert out.shape == (B, L)
    assert jnp.allclose(out, ref, atol=1e-5, rtol=1e-5)

    # --- 2) default bf16 params (half weight HBM traffic), f32 accumulation --
    params_bf16 = prepare_head_params(w1, b1, w2, b2)  # bfloat16 by default
    out_bf16 = jax.block_until_ready(
        wav2vec2_classification_head(x, params_bf16, tb=32))
    assert out_bf16.shape == (B, L)
    assert jnp.allclose(out_bf16.astype(jnp.float32), ref, atol=3e-2, rtol=3e-2)

    # --- 3) ragged batch (no pad copy) + K-streamed dense weight -------------
    B3, H3, L3 = 50, 256, 4
    x3, w13, b13, w23, b23 = make_inputs(B3, H3, L3, k2)
    ref3 = reference(x3, w13, b13, w23, b23)
    params3 = prepare_head_params(w13, b13, w23, b23, param_dtype=jnp.float32)
    out3 = jax.block_until_ready(
        wav2vec2_classification_head(x3, params3, tb=64, tk=128))
    assert out3.shape == (B3, L3)
    assert jnp.allclose(out3, ref3, atol=1e-4, rtol=1e-4)

    print("KERNEL_OK")
</pallas_src>

<mosaic_0001>
module attributes {stable_mosaic.version = 11 : i64} {
  func.func @_head_kernel(%arg0: i32, %arg1: i32, %arg2: memref<32x32xf32, #tpu.memory_space<vmem>>, %arg3: memref<32x32xf32, #tpu.memory_space<vmem>>, %arg4: memref<1x32xf32, #tpu.memory_space<vmem>>, %arg5: memref<32x128xf32, #tpu.memory_space<vmem>>, %arg6: memref<1x128xf32, #tpu.memory_space<vmem>>, %arg7: memref<32x128xf32, #tpu.memory_space<vmem>>, %arg8: memref<32x32xf32, #tpu.memory_space<vmem>>) attributes {dimension_semantics = [#tpu.dimension_semantics<arbitrary>, #tpu.dimension_semantics<arbitrary>], iteration_bounds = array<i64: 2, 1>, scalar_prefetch = 0 : i64, scratch_operands = 1 : i64, tpu.core_type = #tpu.core_type<tc>, window_params = [{transform_indices = @transform_0, window_bounds = array<i64: 32, 32>}, {pipeline_mode = #tpu.pipeline_mode<synchronous>, transform_indices = @transform_1, window_bounds = array<i64: 32, 32>}, {pipeline_mode = #tpu.pipeline_mode<synchronous>, transform_indices = @transform_2, window_bounds = array<i64: 1, 32>}, {pipeline_mode = #tpu.pipeline_mode<synchronous>, transform_indices = @transform_3, window_bounds = array<i64: 32, 128>}, {pipeline_mode = #tpu.pipeline_mode<synchronous>, transform_indices = @transform_4, window_bounds = array<i64: 1, 128>}, {transform_indices = @transform_5, window_bounds = array<i64: 32, 128>}]} {
    %c0 = arith.constant 0 : index
    %c0_0 = arith.constant 0 : index
    %0 = vector.load %arg2[%c0, %c0_0] : memref<32x32xf32, #tpu.memory_space<vmem>>, vector<32x32xf32>
    %c0_1 = arith.constant 0 : index
    %c0_2 = arith.constant 0 : index
    %1 = vector.load %arg3[%c0_1, %c0_2] : memref<32x32xf32, #tpu.memory_space<vmem>>, vector<32x32xf32>
    %cst = arith.constant dense<0.000000e+00> : vector<32x32xf32>
    %2 = tpu.matmul %0, %1, %cst {dimension_numbers = #tpu.dot_dimension_numbers<[1], [0], [0], [1], [0, 0, 1, 1], [], []>, precision = #tpu.contract_precision<fp32>} : vector<32x32xf32>, vector<32x32xf32>, vector<32x32xf32> -> vector<32x32xf32>
    %c0_i32 = arith.constant 0 : i32
    %3 = arith.cmpi eq, %arg1, %c0_i32 : i32
    %4 = arith.extui %3 : i1 to i32
    %c0_i32_3 = arith.constant 0 : i32
    %5 = arith.cmpi ne, %4, %c0_i32_3 : i32
    scf.if %5 {
      %c0_8 = arith.constant 0 : index
      %c0_9 = arith.constant 0 : index
      %12 = vector.load %arg8[%c0_8, %c0_9] : memref<32x32xf32, #tpu.memory_space<vmem>>, vector<32x32xf32>
      tpu.vector_store %arg8[%c0_8, %c0_9], %2 {strides = array<i32>} : memref<32x32xf32, #tpu.memory_space<vmem>>, vector<32x32xf32>,
    } else {
    }
    %c0_i32_4 = arith.constant 0 : i32
    %6 = arith.cmpi sgt, %arg1, %c0_i32_4 : i32
    %7 = arith.extui %6 : i1 to i32
    %c0_i32_5 = arith.constant 0 : i32
    %8 = arith.cmpi ne, %7, %c0_i32_5 : i32
    scf.if %8 {
      %c0_8 = arith.constant 0 : index
      %c0_9 = arith.constant 0 : index
      %12 = vector.load %arg8[%c0_8, %c0_9] : memref<32x32xf32, #tpu.memory_space<vmem>>, vector<32x32xf32>
      %13 = arith.addf %12, %2 : vector<32x32xf32>
      %c0_10 = arith.constant 0 : index
      %c0_11 = arith.constant 0 : index
      %14 = vector.load %arg8[%c0_10, %c0_11] : memref<32x32xf32, #tpu.memory_space<vmem>>, vector<32x32xf32>
      tpu.vector_store %arg8[%c0_10, %c0_11], %13 {strides = array<i32>} : memref<32x32xf32, #tpu.memory_space<vmem>>, vector<32x32xf32>,
    } else {
    }
    %c0_i32_6 = arith.constant 0 : i32
    %9 = arith.cmpi eq, %arg1, %c0_i32_6 : i32
    %10 = arith.extui %9 : i1 to i32
    %c0_i32_7 = arith.constant 0 : i32
    %11 = arith.cmpi ne, %10, %c0_i32_7 : i32
    scf.if %11 {
      %c0_8 = arith.constant 0 : index
      %c0_9 = arith.constant 0 : index
      %12 = vector.load %arg8[%c0_8, %c0_9] : memref<32x32xf32, #tpu.memory_space<vmem>>, vector<32x32xf32>
      %c0_10 = arith.constant 0 : index
      %c0_11 = arith.constant 0 : index
      %13 = vector.load %arg4[%c0_10, %c0_11] : memref<1x32xf32, #tpu.memory_space<vmem>>, vector<1x32xf32>
      %14 = vector.broadcast %13 : vector<1x32xf32> to vector<32x32xf32>
      %15 = arith.addf %12, %14 : vector<32x32xf32>
      %16 = math.tanh %15 : vector<32x32xf32>
      %c0_12 = arith.constant 0 : index
      %c0_13 = arith.constant 0 : index
      %17 = vector.load %arg5[%c0_12, %c0_13] : memref<32x128xf32, #tpu.memory_space<vmem>>, vector<32x128xf32>
      %cst_14 = arith.constant dense<0.000000e+00> : vector<32x128xf32>
      %18 = tpu.matmul %16, %17, %cst_14 {dimension_numbers = #tpu.dot_dimension_numbers<[1], [0], [0], [1], [0, 0, 1, 1], [], []>, precision = #tpu.contract_precision<fp32>} : vector<32x32xf32>, vector<32x128xf32>, vector<32x128xf32> -> vector<32x128xf32>
      %c0_15 = arith.constant 0 : index
      %c0_16 = arith.constant 0 : index
      %19 = vector.load %arg6[%c0_15, %c0_16] : memref<1x128xf32, #tpu.memory_space<vmem>>, vector<1x128xf32>
      %20 = vector.broadcast %19 : vector<1x128xf32> to vector<32x128xf32>
      %21 = arith.addf %18, %20 : vector<32x128xf32>
      %c0_17 = arith.constant 0 : index
      %c0_18 = arith.constant 0 : index
      %22 = vector.load %arg7[%c0_17, %c0_18] : memref<32x128xf32, #tpu.memory_space<vmem>>, vector<32x128xf32>
      tpu.vector_store %arg7[%c0_17, %c0_18], %21 {strides = array<i32>} : memref<32x128xf32, #tpu.memory_space<vmem>>, vector<32x128xf32>,
    } else {
    }
    return
  }
  func.func @transform_0(%arg0: i32, %arg1: i32) -> (i32, i32) {
    %c0_i32 = arith.constant 0 : i32
    return %arg0, %arg1 : i32, i32
  }
  func.func @transform_1(%arg0: i32, %arg1: i32) -> (i32, i32) {
    %c0_i32 = arith.constant 0 : i32
    %c0_i32_0 = arith.constant 0 : i32
    %c0_i32_1 = arith.constant 0 : i32
    return %c0_i32, %c0_i32_0 : i32, i32
  }
  func.func @transform_2(%arg0: i32, %arg1: i32) -> (i32, i32) {
    %c0_i32 = arith.constant 0 : i32
    %c0_i32_0 = arith.constant 0 : i32
    %c0_i32_1 = arith.constant 0 : i32
    return %c0_i32, %c0_i32_0 : i32, i32
  }
  func.func @transform_3(%arg0: i32, %arg1: i32) -> (i32, i32) {
    %c0_i32 = arith.constant 0 : i32
    %c0_i32_0 = arith.constant 0 : i32
    %c0_i32_1 = arith.constant 0 : i32
    return %c0_i32, %c0_i32_0 : i32, i32
  }
  func.func @transform_4(%arg0: i32, %arg1: i32) -> (i32, i32) {
    %c0_i32 = arith.constant 0 : i32
    %c0_i32_0 = arith.constant 0 : i32
    %c0_i32_1 = arith.constant 0 : i32
    return %c0_i32, %c0_i32_0 : i32, i32
  }
  func.func @transform_5(%arg0: i32, %arg1: i32) -> (i32, i32) {
    %c0_i32 = arith.constant 0 : i32
    %c0_i32_0 = arith.constant 0 : i32
    return %arg0, %c0_i32 : i32, i32
  }
}

</mosaic_0001>

<llo_original>
// kernel: tpu_custom_call.1
$region0: #{tpu_custom_call.1}
  #allocation0 [shape = 'u32[]', space=smem, size = 0x4, offset = 0x4, fixed_abs, tag = 'smem constant byte address 0x4 - core index']
  #allocation1 [shape = 'u32[144,128]{1,0:T(1,128)}', space=vmem, size = 0x12000, scoped, tag = 'internal scratch']
  #allocation2 [shape = 'f32[32,32]{1,0:T(8,128)}', space=vmem, size = 0x4000, scoped, tag = 'scratch operand']
  %s0 = inlined_call_operand.vmem [shape: f32[64,32], index: 0, kind: input, shape index: {}]
  %s1 = inlined_call_operand.vmem [shape: f32[32,32], index: 1, kind: input, shape index: {}]
  %s2 = inlined_call_operand.vmem [shape: f32[1,32], index: 2, kind: input, shape index: {}]
  %s3 = inlined_call_operand.vmem [shape: f32[32,128], index: 3, kind: input, shape index: {}]
  %s4 = inlined_call_operand.vmem [shape: f32[1,128], index: 4, kind: input, shape index: {}]
  %s5 = inlined_call_operand.hbm [shape: f32[64,128], index: 5, kind: output, shape index: {}]
  %s6 = sld [smem:[#allocation0]]
  $region65: #{tpu_custom_call.1} parent=0
    _
  %s8 = ssub.s32 1, %s6
  %s9 = scalar_select 0, %s8, %s6
  $region1: #{tpu_custom_call.1} parent=0
    #allocation3 [shape = 'u8[32768]{0}', space=vmem, size = 0x8000, scoped, tag = 'output window, operand 0']
    #allocation4 [shape = 's32[2]{0}', space=sflag, size = 0x8, scoped, tag = 'scoped memory for tpu_custom_call.1']
    %10 = vsyncpa [#allocation4], 0
    %s11 = scalar_lea.sflag [#allocation4], 1
    %12 = vsyncpa %s11, 0
    loop: start=0, step=1, limit=4
    $region2: #{tpu_custom_call.1} parent=1 // loop_pre_header
      _
    $region3: #{tpu_custom_call.1} parent=1 // loop_header
      %s14 = sphi 0, %s18
      %p15 = scmp.ge.s32.totalorder %s14, 4
      %s21 = sphi 0, %s33
      %s22 = sphi 0, %s29
      %s23 = sphi 0, %s21
      %s24 = sphi 0, %s22
      %s25 = sphi 0, %s23
      %s26 = sphi 0, %s24
      %s38 = sphi 0, %s40
      %s41 = sphi 0, %s38
      %s42 = sphi 0, %s41
      %s58 = sphi 0, %s42
      %s62 = sphi 0, %s62
      %s64 = sphi 0, %s62
      %s65 = sphi 0, %s64
      %s79 = sphi 0, %s65
      %s83 = sphi 0, %s83
      %s85 = sphi 0, %s83
      %s86 = sphi 0, %s85
      %s100 = sphi 0, %s86
      %s104 = sphi 0, %s104
      %s106 = sphi 0, %s104
      %s107 = sphi 0, %s106
      %s121 = sphi 0, %s107
      %s125 = sphi 0, %s125
      %s127 = sphi 0, %s125
      %s128 = sphi 0, %s127
      %s142 = sphi 0, %s128
      %s148 = sphi 0, %s150
      %s151 = sphi 0, %s148
      %s152 = sphi 0, %s151
      %s168 = sphi 0, %s152
    $region4: #{tpu_custom_call.1} parent=1 // loop_header_branch
      %17 = sbr.rel (%p15) target = $region8
    $region5: #{tpu_custom_call.1} parent=1 // loop_body
      %s19 = ssub.s32 %s14, 1
      %s20 = ssub.s32 %s14, 2
      %s27 = sadd.s32 1, %s22
      %p28 = scmp.ge.s32.totalorder %s27, 1
      %s29 = scalar_select %p28, 0, %s27
      %s30 = sadd.s32 1, %s21
      %s31 = scalar_select %p28, %s30, %s21
      %p32 = scmp.ge.s32.totalorder %s31, 2
      %s33 = scalar_select %p32, 0, %s31
      %s34 = ssub.s32 %s21, %s33
      %s35 = ssub.s32 %s22, %s29
      %s36 = sor.u32 %s34, %s35
      %p37 = scmp.eq.s32.totalorder %s36, 0
      %s39 = sadd.s32 %s38, 1
      %s40 = scalar_select %p37, %s38, %s39
      %p43 = pneg %p37
      %p44 = scmp.eq.s32.totalorder %s14, 1
      %p45 = por %p43, %p44
      %p46 = scmp.ne.s32.totalorder %s38, %s41
      %p47 = scmp.eq.s32.totalorder %s14, 0
      %p48 = por %p46, %p47
      %p49 = scmp.ne.s32.totalorder %s38, %s41
      %p50 = scmp.eq.s32.totalorder %s19, 1
      %p51 = por %p49, %p50
      %p52 = scmp.ne.s32.totalorder %s41, %s42
      %p53 = scmp.eq.s32.totalorder %s19, 0
      %p54 = por %p52, %p53
      %p55 = scmp.ne.s32.totalorder %s41, %s42
      %p56 = scmp.eq.s32.totalorder %s20, 1
      %p57 = por %p55, %p56
      %p59 = scmp.ne.s32.totalorder %s42, %s58
      %p60 = scmp.eq.s32.totalorder %s20, 0
      %p61 = por %p59, %p60
      %s63 = sadd.s32 %s62, 1
      %p66 = scmp.eq.s32.totalorder %s14, 1
      %p67 = scmp.ne.s32.totalorder %s62, %s64
      %p68 = scmp.eq.s32.totalorder %s14, 0
      %p69 = por %p67, %p68
      %p70 = scmp.ne.s32.totalorder %s62, %s64
      %p71 = scmp.eq.s32.totalorder %s19, 1
      %p72 = por %p70, %p71
      %p73 = scmp.ne.s32.totalorder %s64, %s65
      %p74 = scmp.eq.s32.totalorder %s19, 0
      %p75 = por %p73, %p74
      %p76 = scmp.ne.s32.totalorder %s64, %s65
      %p77 = scmp.eq.s32.totalorder %s20, 1
      %p78 = por %p76, %p77
      %p80 = scmp.ne.s32.totalorder %s65, %s79
      %p81 = scmp.eq.s32.totalorder %s20, 0
      %p82 = por %p80, %p81
      %s84 = sadd.s32 %s83, 1
      %p87 = scmp.eq.s32.totalorder %s14, 1
      %p88 = scmp.ne.s32.totalorder %s83, %s85
      %p89 = scmp.eq.s32.totalorder %s14, 0
      %p90 = por %p88, %p89
      %p91 = scmp.ne.s32.totalorder %s83, %s85
      %p92 = scmp.eq.s32.totalorder %s19, 1
      %p93 = por %p91, %p92
      %p94 = scmp.ne.s32.totalorder %s85, %s86
      %p95 = scmp.eq.s32.totalorder %s19, 0
      %p96 = por %p94, %p95
      %p97 = scmp.ne.s32.totalorder %s85, %s86
      %p98 = scmp.eq.s32.totalorder %s20, 1
      %p99 = por %p97, %p98
      %p101 = scmp.ne.s32.totalorder %s86, %s100
      %p102 = scmp.eq.s32.totalorder %s20, 0
      %p103 = por %p101, %p102
      %s105 = sadd.s32 %s104, 1
      %p108 = scmp.eq.s32.totalorder %s14, 1
      %p109 = scmp.ne.s32.totalorder %s104, %s106
      %p110 = scmp.eq.s32.totalorder %s14, 0
      %p111 = por %p109, %p110
      %p112 = scmp.ne.s32.totalorder %s104, %s106
      %p113 = scmp.eq.s32.totalorder %s19, 1
      %p114 = por %p112, %p113
      %p115 = scmp.ne.s32.totalorder %s106, %s107
      %p116 = scmp.eq.s32.totalorder %s19, 0
      %p117 = por %p115, %p116
      %p118 = scmp.ne.s32.totalorder %s106, %s107
      %p119 = scmp.eq.s32.totalorder %s20, 1
      %p120 = por %p118, %p119
      %p122 = scmp.ne.s32.totalorder %s107, %s121
      %p123 = scmp.eq.s32.totalorder %s20, 0
      %p124 = por %p122, %p123
      %s126 = sadd.s32 %s125, 1
      %p129 = scmp.eq.s32.totalorder %s14, 1
      %p130 = scmp.ne.s32.totalorder %s125, %s127
      %p131 = scmp.eq.s32.totalorder %s14, 0
      %p132 = por %p130, %p131
      %p133 = scmp.ne.s32.totalorder %s125, %s127
      %p134 = scmp.eq.s32.totalorder %s19, 1
      %p135 = por %p133, %p134
      %p136 = scmp.ne.s32.totalorder %s127, %s128
      %p137 = scmp.eq.s32.totalorder %s19, 0
      %p138 = por %p136, %p137
      %p139 = scmp.ne.s32.totalorder %s127, %s128
      %p140 = scmp.eq.s32.totalorder %s20, 1
      %p141 = por %p139, %p140
      %p143 = scmp.ne.s32.totalorder %s128, %s142
      %p144 = scmp.eq.s32.totalorder %s20, 0
      %p145 = por %p143, %p144
      %s146 = ssub.s32 %s21, %s33
      %p147 = scmp.eq.s32.totalorder %s146, 0
      %s149 = sadd.s32 %s148, 1
      %s150 = scalar_select %p147, %s148, %s149
      %p153 = pneg %p147
      %p154 = scmp.eq.s32.totalorder %s14, 1
      %p155 = por %p153, %p154
      %p156 = scmp.ne.s32.totalorder %s148, %s151
      %p157 = scmp.eq.s32.totalorder %s14, 0
      %p158 = por %p156, %p157
      %p159 = scmp.ne.s32.totalorder %s148, %s151
      %p160 = scmp.eq.s32.totalorder %s19, 1
      %p161 = por %p159, %p160
      %p162 = scmp.ne.s32.totalorder %s151, %s152
      %p163 = scmp.eq.s32.totalorder %s19, 0
      %p164 = por %p162, %p163
      %p165 = scmp.ne.s32.totalorder %s151, %s152
      %p166 = scmp.eq.s32.totalorder %s20, 1
      %p167 = por %p165, %p166
      %p169 = scmp.ne.s32.totalorder %s152, %s168
      %p170 = scmp.eq.s32.totalorder %s20, 0
      %p171 = por %p169, %p170
      %p172 = scmp.le.s32.totalorder 1, %s14
      %p173 = scmp.lt.s32.totalorder %s14, 3
      %p174 = pnand %p172, %p173
      %p175 = pneg %p174
      // Predicated region
      $region9: #{tpu_custom_call.1} parent=5 // pred_check
        _
      $region10: #{tpu_custom_call.1} parent=5 // pred_check_branch
        %177 = sbr.rel (%p174) target = $region12
      $region11: #{tpu_custom_call.1} parent=5 // pred_region
        %s178 = ssub.s32 %s14, 1
        // Predicated region
        $region13: #{tpu_custom_call.1} parent=11 // pred_check
          %p179 = pneg %p75
        $region14: #{tpu_custom_call.1} parent=11 // pred_check_branch
          %181 = sbr.rel (%p179) target = $region16
        $region15: #{tpu_custom_call.1} parent=11 // pred_region
          _
        $region16: #{tpu_custom_call.1} parent=11 // pred_fallthru
          _
        // Predicated region
        $region17: #{tpu_custom_call.1} parent=11 // pred_check
          %p182 = pneg %p96
        $region18: #{tpu_custom_call.1} parent=11 // pred_check_branch
          %184 = sbr.rel (%p182) target = $region20
        $region19: #{tpu_custom_call.1} parent=11 // pred_region
          _
        $region20: #{tpu_custom_call.1} parent=11 // pred_fallthru
          _
        // Predicated region
        $region21: #{tpu_custom_call.1} parent=11 // pred_check
          %p185 = pneg %p117
        $region22: #{tpu_custom_call.1} parent=11 // pred_check_branch
          %187 = sbr.rel (%p185) target = $region24
        $region23: #{tpu_custom_call.1} parent=11 // pred_region
          _
        $region24: #{tpu_custom_call.1} parent=11 // pred_fallthru
          _
        // Predicated region
        $region25: #{tpu_custom_call.1} parent=11 // pred_check
          %p188 = pneg %p138
        $region26: #{tpu_custom_call.1} parent=11 // pred_check_branch
          %190 = sbr.rel (%p188) target = $region28
        $region27: #{tpu_custom_call.1} parent=11 // pred_region
          _
        $region28: #{tpu_custom_call.1} parent=11 // pred_fallthru
          _
      $region12: #{tpu_custom_call.1} parent=5 // pred_fallthru
        _
      %p191 = scmp.lt.s32.totalorder %s14, 2
      // Predicated region
      $region29: #{tpu_custom_call.1} parent=5 // pred_check
        %p192 = pneg %p191
      $region30: #{tpu_custom_call.1} parent=5 // pred_check_branch
        %194 = sbr.rel (%p192) target = $region32
      $region31: #{tpu_custom_call.1} parent=5 // pred_region
        // Predicated region
        $region33: #{tpu_custom_call.1} parent=31 // pred_check
          %p195 = pneg %p48
        $region34: #{tpu_custom_call.1} parent=31 // pred_check_branch
          %197 = sbr.rel (%p195) target = $region36
        $region35: #{tpu_custom_call.1} parent=31 // pred_region
          %s198 = smul.u32 4, %s21
          %p199 = scmp.lt.s32.totalorder %s198, 7
          %s200 = scalar_select %p199, %s198, 7
          %p201 = scmp.lt.s32.totalorder %s22, 0
          %s202 = scalar_select %p201, %s22, 0
          %s203 = sadd.s32 %s202, %s200
          %s204 = smul.addr %s203, 8
          %s205 = scalar_lea.vmem %s0, %s204
          %s206 = smul.u32 4, %s21
        $region36: #{tpu_custom_call.1} parent=31 // pred_fallthru
          _
      $region32: #{tpu_custom_call.1} parent=5 // pred_fallthru
        _
      %p207 = scmp.le.s32.totalorder 1, %s14
      %p208 = scmp.lt.s32.totalorder %s14, 3
      %p209 = pnand %p207, %p208
      %p210 = pneg %p209
      // Predicated region
      $region37: #{tpu_custom_call.1} parent=5 // pred_check
        _
      $region38: #{tpu_custom_call.1} parent=5 // pred_check_branch
        %212 = sbr.rel (%p209) target = $region40
      $region39: #{tpu_custom_call.1} parent=5 // pred_region
        %s213 = ssub.s32 %s14, 1
        %s214 = smul.u32 4, %s23
        %p215 = scmp.lt.s32.totalorder %s214, 7
        %s216 = scalar_select %p215, %s214, 7
        %p217 = scmp.lt.s32.totalorder %s24, 0
        %s218 = scalar_select %p217, %s24, 0
        %s219 = sadd.s32 %s218, %s216
        %s220 = smul.addr %s219, 8
        %s221 = scalar_lea.vmem %s0, %s220
        %p222 = pneg %p54
        %p223 = pneg %p51
        %p224 = pneg %p75
        %p225 = pneg %p72
        %p226 = pneg %p96
        %p227 = pneg %p93
        %p228 = pneg %p117
        %p229 = pneg %p114
        %p230 = pneg %p138
        %p231 = pneg %p135
        %p232 = pneg %p164
        %p233 = pneg %p161
        %s234 = sand.u32 %s151, 1
        %s235 = scalar_lea.sflag [#allocation4], %s234
        %s236 = sand.u32 %s151, 1
        %s237 = smul.addr %s236, 32
        %s238 = scalar_lea.vmem [#allocation3], %s237
        %s239 = smul.u32 4, %s23
        %p240 = scmp.lt.s32.totalorder %s239, 7
        %s241 = scalar_select %p240, %s239, 7
        %p242 = scmp.lt.s32.totalorder %s24, 0
        %s243 = scalar_select %p242, %s24, 0
        %s244 = sadd.s32 %s243, %s241
        %s245 = smul.addr %s244, 8
        %s246 = scalar_lea.vmem %s0, %s245
        %s247 = smul.u32 4, %s23
        %s248 = smul.u32 4, %s23
        %v249 = vld [vmem:[%s246] sm:$0xff]
        %v250 = vld [vmem:[%s246 + $0x8] sm:$0xff]
        %v251 = vld [vmem:[%s246 + $0x10] sm:$0xff]
        %v252 = vld [vmem:[%s246 + $0x18] sm:$0xff]
        %v253 = vld [vmem:[%s1] sm:$0xff]
        %v254 = vld [vmem:[%s1 + $0x8] sm:$0xff]
        %v255 = vld [vmem:[%s1 + $0x10] sm:$0xff]
        %v256 = vld [vmem:[%s1 + $0x18] sm:$0xff]
        %vm257 = vcmask 261120
        %v259 = vsel %vm257, %v249, 0
        %v262 = vsel %vm257, %v250, 0
        %v265 = vsel %vm257, %v251, 0
        %v268 = vsel %vm257, %v252, 0
        %270 = vmatprep.subr.mxu0 0.0
        %v271 = vand.u32 %v253, 4294901760
        %272 = vmatpush1.msra.mxu0 %v271
        %273 = vmatprep.subr.mxu0 0.0
        %v274 = vand.u32 %v254, 4294901760
        %275 = vmatpush1.msra.mxu0 %v274
        %276 = vmatprep.subr.mxu0 0.0
        %v277 = vand.u32 %v255, 4294901760
        %278 = vmatpush1.msra.mxu0 %v277
        %279 = vmatprep.subr.mxu0 0.0
        %v280 = vand.u32 %v256, 4294901760
        %281 = vmatpush1.msra.mxu0 %v280
        %282 = vmatprep.subr.mxu0 0.0
        %283 = vmatpush1.msra.mxu0 0.0
        %284 = vmatprep.subr.mxu0 0.0
        %285 = vmatpush1.msra.mxu0 0.0
        %286 = vmatprep.subr.mxu0 0.0
        %287 = vmatpush1.msra.mxu0 0.0
        %288 = vmatprep.subr.mxu0 0.0
        %289 = vmatpush1.msra.mxu0 0.0
        %290 = vmatprep.subr.mxu0 0.0
        %291 = vmatpush1.msra.mxu0 0.0
        %292 = vmatprep.subr.mxu0 0.0
        %293 = vmatpush1.msra.mxu0 0.0
        %294 = vmatprep.subr.mxu0 0.0
        %295 = vmatpush1.msra.mxu0 0.0
        %296 = vmatprep.subr.mxu0 0.0
        %297 = vmatpush1.msra.mxu0 0.0
        %298 = vmatprep.subr.mxu0 0.0
        %299 = vmatpush1.msra.mxu0 0.0
        %300 = vmatprep.subr.mxu0 0.0
        %301 = vmatpush1.msra.mxu0 0.0
        %302 = vmatprep.subr.mxu0 0.0
        %303 = vmatpush1.msra.mxu0 0.0
        %304 = vmatprep.subr.mxu0 0.0
        %305 = vmatpush1.msra.mxu0 0.0
        %306 = vmatprep.subr.mxu0 0.0
        %307 = vmatpush1.msra.mxu0 0.0
        %308 = vmatprep.subr.mxu0 0.0
        %309 = vmatpush1.msra.mxu0 0.0
        %310 = vmatprep.subr.mxu0 0.0
        %311 = vmatpush1.msra.mxu0 0.0
        %312 = vmatprep.subr.mxu0 0.0
        %313 = vmatpush1.msra.mxu0 0.0
        %314 = vmatprep.subr.mxu0 0.0
        %315 = vmatpush1.msra.mxu0 0.0
        %316 = vmatprep.subr.mxu0 0.0
        %317 = vmatpush1.msra.mxu0 0.0
        %318 = vmatprep.subr.mxu0 0.0
        %319 = vmatpush1.msra.mxu0 0.0
        %320 = vmatprep.subr.mxu0 0.0
        %321 = vmatpush1.msra.mxu0 0.0
        %322 = vmatprep.subr.mxu0 0.0
        %323 = vmatpush1.msra.mxu0 0.0
        %324 = vmatprep.subr.mxu0 0.0
        %325 = vmatpush1.msra.mxu0 0.0
        %326 = vmatprep.subr.mxu0 0.0
        %327 = vmatpush1.msra.mxu0 0.0
        %328 = vmatprep.subr.mxu0 0.0
        %329 = vmatpush1.msra.mxu0 0.0
        %330 = vmatprep.subr.mxu0 0.0
        %331 = vmatpush1.msra.mxu0 0.0
        %332 = vmatprep.subr.mxu0 0.0
        %333 = vmatpush1.msra.mxu0 0.0
        %334 = vmatprep.subr.mxu0 0.0
        %335 = vmatpush1.msra.mxu0 0.0
        %336 = vmatprep.subr.mxu0 0.0
        %337 = vmatpush1.msra.mxu0 0.0
        %338 = vmatprep.mubr.f32.mxu0 0.0
        %v339 = vand.u32 %v259, 4294901760
        %v340 = vsub.f32 %v259, %v339
        %v341 = vand.u32 %v340, 4294901760
        %v342 = vsub.f32 %v340, %v341
        %v343 = vand.u32 %v342, 4294901760
        %344 = vmatmul.mubr.f32.gmra.mrb[0].mxu0 %v343
        %v345 = vpop.f32.mrb[0].mxu0
        %v346 = vadd.f32 0.0, %v345
        %v347 = vpop.f32.mrb[0].mxu0
        %348 = vmatprep.mubr.f32.mxu0 0.0
        %v349 = vand.u32 %v262, 4294901760
        %v350 = vsub.f32 %v262, %v349
        %v351 = vand.u32 %v350, 4294901760
        %v352 = vsub.f32 %v350, %v351
        %v353 = vand.u32 %v352, 4294901760
        %354 = vmatmul.mubr.f32.gmra.mrb[0].mxu0 %v353
        %v355 = vpop.f32.mrb[0].mxu0
        %v356 = vadd.f32 0.0, %v355
        %v357 = vpop.f32.mrb[0].mxu0
        %358 = vmatprep.mubr.f32.mxu0 0.0
        %v359 = vand.u32 %v265, 4294901760
        %v360 = vsub.f32 %v265, %v359
        %v361 = vand.u32 %v360, 4294901760
        %v362 = vsub.f32 %v360, %v361
        %v363 = vand.u32 %v362, 4294901760
        %364 = vmatmul.mubr.f32.gmra.mrb[0].mxu0 %v363
        %v365 = vpop.f32.mrb[0].mxu0
        %v366 = vadd.f32 0.0, %v365
        %v367 = vpop.f32.mrb[0].mxu0
        %368 = vmatprep.mubr.f32.mxu0 0.0
        %v369 = vand.u32 %v268, 4294901760
        %v370 = vsub.f32 %v268, %v369
        %v371 = vand.u32 %v370, 4294901760
        %v372 = vsub.f32 %v370, %v371
        %v373 = vand.u32 %v372, 4294901760
        %374 = vmatmul.mubr.f32.gmra.mrb[0].mxu0 %v373
        %v375 = vpop.f32.mrb[0].mxu0
        %v376 = vadd.f32 0.0, %v375
        %v377 = vpop.f32.mrb[0].mxu0
        %378 = vdwg.mxu0
        %379 = vmatprep.subr.mxu0 0.0
        %v380 = vand.u32 %v253, 4294901760
        %v381 = vsub.f32 %v253, %v380
        %v382 = vand.u32 %v381, 4294901760
        %v383 = vsub.f32 %v381, %v382
        %v384 = vand.u32 %v383, 4294901760
        %385 = vmatpush1.msra.mxu0 %v384
        %386 = vmatprep.subr.mxu0 0.0
        %v387 = vand.u32 %v254, 4294901760
        %v388 = vsub.f32 %v254, %v387
        %v389 = vand.u32 %v388, 4294901760
        %v390 = vsub.f32 %v388, %v389
        %v391 = vand.u32 %v390, 4294901760
        %392 = vmatpush1.msra.mxu0 %v391
        %393 = vmatprep.subr.mxu0 0.0
        %v394 = vand.u32 %v255, 4294901760
        %v395 = vsub.f32 %v255, %v394
        %v396 = vand.u32 %v395, 4294901760
        %v397 = vsub.f32 %v395, %v396
        %v398 = vand.u32 %v397, 4294901760
        %399 = vmatpush1.msra.mxu0 %v398
        %400 = vmatprep.subr.mxu0 0.0
        %v401 = vand.u32 %v256, 4294901760
        %v402 = vsub.f32 %v256, %v401
        %v403 = vand.u32 %v402, 4294901760
        %v404 = vsub.f32 %v402, %v403
        %v405 = vand.u32 %v404, 4294901760
        %406 = vmatpush1.msra.mxu0 %v405
        %407 = vmatprep.subr.mxu0 0.0
        %408 = vmatpush1.msra.mxu0 0.0
        %409 = vmatprep.subr.mxu0 0.0
        %410 = vmatpush1.msra.mxu0 0.0
        %411 = vmatprep.subr.mxu0 0.0
        %412 = vmatpush1.msra.mxu0 0.0
        %413 = vmatprep.subr.mxu0 0.0
        %414 = vmatpush1.msra.mxu0 0.0
        %415 = vmatprep.subr.mxu0 0.0
        %416 = vmatpush1.msra.mxu0 0.0
        %417 = vmatprep.subr.mxu0 0.0
        %418 = vmatpush1.msra.mxu0 0.0
        %419 = vmatprep.subr.mxu0 0.0
        %420 = vmatpush1.msra.mxu0 0.0
        %421 = vmatprep.subr.mxu0 0.0
        %422 = vmatpush1.msra.mxu0 0.0
        %423 = vmatprep.subr.mxu0 0.0
        %424 = vmatpush1.msra.mxu0 0.0
        %425 = vmatprep.subr.mxu0 0.0
        %426 = vmatpush1.msra.mxu0 0.0
        %427 = vmatprep.subr.mxu0 0.0
        %428 = vmatpush1.msra.mxu0 0.0
        %429 = vmatprep.subr.mxu0 0.0
        %430 = vmatpush1.msra.mxu0 0.0
        %431 = vmatprep.subr.mxu0 0.0
        %432 = vmatpush1.msra.mxu0 0.0
        %433 = vmatprep.subr.mxu0 0.0
        %434 = vmatpush1.msra.mxu0 0.0
        %435 = vmatprep.subr.mxu0 0.0
        %436 = vmatpush1.msra.mxu0 0.0
        %437 = vmatprep.subr.mxu0 0.0
        %438 = vmatpush1.msra.mxu0 0.0
        %439 = vmatprep.subr.mxu0 0.0
        %440 = vmatpush1.msra.mxu0 0.0
        %441 = vmatprep.subr.mxu0 0.0
        %442 = vmatpush1.msra.mxu0 0.0
        %443 = vmatprep.subr.mxu0 0.0
        %444 = vmatpush1.msra.mxu0 0.0
        %445 = vmatprep.subr.mxu0 0.0
        %446 = vmatpush1.msra.mxu0 0.0
        %447 = vmatprep.subr.mxu0 0.0
        %448 = vmatpush1.msra.mxu0 0.0
        %449 = vmatprep.subr.mxu0 0.0
        %450 = vmatpush1.msra.mxu0 0.0
        %451 = vmatprep.subr.mxu0 0.0
        %452 = vmatpush1.msra.mxu0 0.0
        %453 = vmatprep.subr.mxu0 0.0
        %454 = vmatpush1.msra.mxu0 0.0
        %455 = vmatprep.subr.mxu0 0.0
        %456 = vmatpush1.msra.mxu0 0.0
        %457 = vmatprep.subr.mxu0 0.0
        %458 = vmatpush1.msra.mxu0 0.0
        %459 = vmatprep.subr.mxu0 0.0
        %460 = vmatpush1.msra.mxu0 0.0
        %461 = vmatprep.subr.mxu0 0.0
        %462 = vmatpush1.msra.mxu0 0.0
        %463 = vmatprep.mubr.f32.mxu0 0.0
        %v464 = vand.u32 %v259, 4294901760
        %465 = vmatmul.mubr.f32.gmra.mrb[0].mxu0 %v464
        %v466 = vpop.f32.mrb[0].mxu0
        %v467 = vadd.f32 %v346, %v466
        %v468 = vpop.f32.mrb[0].mxu0
        %469 = vmatprep.mubr.f32.mxu0 0.0
        %v470 = vand.u32 %v262, 4294901760
        %471 = vmatmul.mubr.f32.gmra.mrb[0].mxu0 %v470
        %v472 = vpop.f32.mrb[0].mxu0
        %v473 = vadd.f32 %v356, %v472
        %v474 = vpop.f32.mrb[0].mxu0
        %475 = vmatprep.mubr.f32.mxu0 0.0
        %v476 = vand.u32 %v265, 4294901760
        %477 = vmatmul.mubr.f32.gmra.mrb[0].mxu0 %v476
        %v478 = vpop.f32.mrb[0].mxu0
        %v479 = vadd.f32 %v366, %v478
        %v480 = vpop.f32.mrb[0].mxu0
        %481 = vmatprep.mubr.f32.mxu0 0.0
        %v482 = vand.u32 %v268, 4294901760
        %483 = vmatmul.mubr.f32.gmra.mrb[0].mxu0 %v482
        %v484 = vpop.f32.mrb[0].mxu0
        %v485 = vadd.f32 %v376, %v484
        %v486 = vpop.f32.mrb[0].mxu0
        %487 = vdwg.mxu0
        %488 = vmatprep.subr.mxu0 0.0
        %v489 = vand.u32 %v253, 4294901760
        %v490 = vsub.f32 %v253, %v489
        %491 = vmatpush1.msra.mxu0 %v490
        %492 = vmatprep.subr.mxu0 0.0
        %v493 = vand.u32 %v254, 4294901760
        %v494 = vsub.f32 %v254, %v493
        %495 = vmatpush1.msra.mxu0 %v494
        %496 = vmatprep.subr.mxu0 0.0
        %v497 = vand.u32 %v255, 4294901760
        %v498 = vsub.f32 %v255, %v497
        %499 = vmatpush1.msra.mxu0 %v498
        %500 = vmatprep.subr.mxu0 0.0
        %v501 = vand.u32 %v256, 4294901760
        %v502 = vsub.f32 %v256, %v501
        %503 = vmatpush1.msra.mxu0 %v502
        %504 = vmatprep.subr.mxu0 0.0
        %505 = vmatpush1.msra.mxu0 0.0
        %506 = vmatprep.subr.mxu0 0.0
        %507 = vmatpush1.msra.mxu0 0.0
        %508 = vmatprep.subr.mxu0 0.0
        %509 = vmatpush1.msra.mxu0 0.0
        %510 = vmatprep.subr.mxu0 0.0
        %511 = vmatpush1.msra.mxu0 0.0
        %512 = vmatprep.subr.mxu0 0.0
        %513 = vmatpush1.msra.mxu0 0.0
        %514 = vmatprep.subr.mxu0 0.0
        %515 = vmatpush1.msra.mxu0 0.0
        %516 = vmatprep.subr.mxu0 0.0
        %517 = vmatpush1.msra.mxu0 0.0
        %518 = vmatprep.subr.mxu0 0.0
        %519 = vmatpush1.msra.mxu0 0.0
        %520 = vmatprep.subr.mxu0 0.0
        %521 = vmatpush1.msra.mxu0 0.0
        %522 = vmatprep.subr.mxu0 0.0
        %523 = vmatpush1.msra.mxu0 0.0
        %524 = vmatprep.subr.mxu0 0.0
        %525 = vmatpush1.msra.mxu0 0.0
        %526 = vmatprep.subr.mxu0 0.0
        %527 = vmatpush1.msra.mxu0 0.0
        %528 = vmatprep.subr.mxu0 0.0
        %529 = vmatpush1.msra.mxu0 0.0
        %530 = vmatprep.subr.mxu0 0.0
        %531 = vmatpush1.msra.mxu0 0.0
        %532 = vmatprep.subr.mxu0 0.0
        %533 = vmatpush1.msra.mxu0 0.0
        %534 = vmatprep.subr.mxu0 0.0
        %535 = vmatpush1.msra.mxu0 0.0
        %536 = vmatprep.subr.mxu0 0.0
        %537 = vmatpush1.msra.mxu0 0.0
        %538 = vmatprep.subr.mxu0 0.0
        %539 = vmatpush1.msra.mxu0 0.0
        %540 = vmatprep.subr.mxu0 0.0
        %541 = vmatpush1.msra.mxu0 0.0
        %542 = vmatprep.subr.mxu0 0.0
        %543 = vmatpush1.msra.mxu0 0.0
        %544 = vmatprep.subr.mxu0 0.0
        %545 = vmatpush1.msra.mxu0 0.0
        %546 = vmatprep.subr.mxu0 0.0
        %547 = vmatpush1.msra.mxu0 0.0
        %548 = vmatprep.subr.mxu0 0.0
        %549 = vmatpush1.msra.mxu0 0.0
        %550 = vmatprep.subr.mxu0 0.0
        %551 = vmatpush1.msra.mxu0 0.0
        %552 = vmatprep.subr.mxu0 0.0
        %553 = vmatpush1.msra.mxu0 0.0
        %554 = vmatprep.subr.mxu0 0.0
        %555 = vmatpush1.msra.mxu0 0.0
        %556 = vmatprep.subr.mxu0 0.0
        %557 = vmatpush1.msra.mxu0 0.0
        %558 = vmatprep.subr.mxu0 0.0
        %559 = vmatpush1.msra.mxu0 0.0
        %560 = vmatprep.mubr.f32.mxu0 0.0
        %v561 = vand.u32 %v259, 4294901760
        %v562 = vsub.f32 %v259, %v561
        %563 = vmatmul.mubr.f32.gmra.mrb[0].mxu0 %v562
        %v564 = vpop.f32.mrb[0].mxu0
        %v565 = vadd.f32 %v467, %v564
        %v566 = vpop.f32.mrb[0].mxu0
        %567 = vmatprep.mubr.f32.mxu0 0.0
        %v568 = vand.u32 %v262, 4294901760
        %v569 = vsub.f32 %v262, %v568
        %570 = vmatmul.mubr.f32.gmra.mrb[0].mxu0 %v569
        %v571 = vpop.f32.mrb[0].mxu0
        %v572 = vadd.f32 %v473, %v571
        %v573 = vpop.f32.mrb[0].mxu0
        %574 = vmatprep.mubr.f32.mxu0 0.0
        %v575 = vand.u32 %v265, 4294901760
        %v576 = vsub.f32 %v265, %v575
        %577 = vmatmul.mubr.f32.gmra.mrb[0].mxu0 %v576
        %v578 = vpop.f32.mrb[0].mxu0
        %v579 = vadd.f32 %v479, %v578
        %v580 = vpop.f32.mrb[0].mxu0
        %581 = vmatprep.mubr.f32.mxu0 0.0
        %v582 = vand.u32 %v268, 4294901760
        %v583 = vsub.f32 %v268, %v582
        %584 = vmatmul.mubr.f32.gmra.mrb[0].mxu0 %v583
        %v585 = vpop.f32.mrb[0].mxu0
        %v586 = vadd.f32 %v485, %v585
        %v587 = vpop.f32.mrb[0].mxu0
        %588 = vdwg.mxu0
        %589 = vmatprep.subr.mxu0 0.0
        %v590 = vand.u32 %v253, 4294901760
        %591 = vmatpush1.msra.mxu0 %v590
        %592 = vmatprep.subr.mxu0 0.0
        %v593 = vand.u32 %v254, 4294901760
        %594 = vmatpush1.msra.mxu0 %v593
        %595 = vmatprep.subr.mxu0 0.0
        %v596 = vand.u32 %v255, 4294901760
        %597 = vmatpush1.msra.mxu0 %v596
        %598 = vmatprep.subr.mxu0 0.0
        %v599 = vand.u32 %v256, 4294901760
        %600 = vmatpush1.msra.mxu0 %v599
        %601 = vmatprep.subr.mxu0 0.0
        %602 = vmatpush1.msra.mxu0 0.0
        %603 = vmatprep.subr.mxu0 0.0
        %604 = vmatpush1.msra.mxu0 0.0
        %605 = vmatprep.subr.mxu0 0.0
        %606 = vmatpush1.msra.mxu0 0.0
        %607 = vmatprep.subr.mxu0 0.0
        %608 = vmatpush1.msra.mxu0 0.0
        %609 = vmatprep.subr.mxu0 0.0
        %610 = vmatpush1.msra.mxu0 0.0
        %611 = vmatprep.subr.mxu0 0.0
        %612 = vmatpush1.msra.mxu0 0.0
        %613 = vmatprep.subr.mxu0 0.0
        %614 = vmatpush1.msra.mxu0 0.0
        %615 = vmatprep.subr.mxu0 0.0
        %616 = vmatpush1.msra.mxu0 0.0
        %617 = vmatprep.subr.mxu0 0.0
        %618 = vmatpush1.msra.mxu0 0.0
        %619 = vmatprep.subr.mxu0 0.0
        %620 = vmatpush1.msra.mxu0 0.0
        %621 = vmatprep.subr.mxu0 0.0
        %622 = vmatpush1.msra.mxu0 0.0
        %623 = vmatprep.subr.mxu0 0.0
        %624 = vmatpush1.msra.mxu0 0.0
        %625 = vmatprep.subr.mxu0 0.0
        %626 = vmatpush1.msra.mxu0 0.0
        %627 = vmatprep.subr.mxu0 0.0
        %628 = vmatpush1.msra.mxu0 0.0
        %629 = vmatprep.subr.mxu0 0.0
        %630 = vmatpush1.msra.mxu0 0.0
        %631 = vmatprep.subr.mxu0 0.0
        %632 = vmatpush1.msra.mxu0 0.0
        %633 = vmatprep.subr.mxu0 0.0
        %634 = vmatpush1.msra.mxu0 0.0
        %635 = vmatprep.subr.mxu0 0.0
        %636 = vmatpush1.msra.mxu0 0.0
        %637 = vmatprep.subr.mxu0 0.0
        %638 = vmatpush1.msra.mxu0 0.0
        %639 = vmatprep.subr.mxu0 0.0
        %640 = vmatpush1.msra.mxu0 0.0
        %641 = vmatprep.subr.mxu0 0.0
        %642 = vmatpush1.msra.mxu0 0.0
        %643 = vmatprep.subr.mxu0 0.0
        %644 = vmatpush1.msra.mxu0 0.0
        %645 = vmatprep.subr.mxu0 0.0
        %646 = vmatpush1.msra.mxu0 0.0
        %647 = vmatprep.subr.mxu0 0.0
        %648 = vmatpush1.msra.mxu0 0.0
        %649 = vmatprep.subr.mxu0 0.0
        %650 = vmatpush1.msra.mxu0 0.0
        %651 = vmatprep.subr.mxu0 0.0
        %652 = vmatpush1.msra.mxu0 0.0
        %653 = vmatprep.subr.mxu0 0.0
        %654 = vmatpush1.msra.mxu0 0.0
        %655 = vmatprep.subr.mxu0 0.0
        %656 = vmatpush1.msra.mxu0 0.0
        %657 = vmatprep.mubr.f32.mxu0 0.0
        %v658 = vand.u32 %v259, 4294901760
        %v659 = vsub.f32 %v259, %v658
        %v660 = vand.u32 %v659, 4294901760
        %661 = vmatmul.mubr.f32.gmra.mrb[0].mxu0 %v660
        %v662 = vpop.f32.mrb[0].mxu0
        %v663 = vadd.f32 %v565, %v662
        %v664 = vpop.f32.mrb[0].mxu0
        %665 = vmatprep.mubr.f32.mxu0 0.0
        %v666 = vand.u32 %v262, 4294901760
        %v667 = vsub.f32 %v262, %v666
        %v668 = vand.u32 %v667, 4294901760
        %669 = vmatmul.mubr.f32.gmra.mrb[0].mxu0 %v668
        %v670 = vpop.f32.mrb[0].mxu0
        %v671 = vadd.f32 %v572, %v670
        %v672 = vpop.f32.mrb[0].mxu0
        %673 = vmatprep.mubr.f32.mxu0 0.0
        %v674 = vand.u32 %v265, 4294901760
        %v675 = vsub.f32 %v265, %v674
        %v676 = vand.u32 %v675, 4294901760
        %677 = vmatmul.mubr.f32.gmra.mrb[0].mxu0 %v676
        %v678 = vpop.f32.mrb[0].mxu0
        %v679 = vadd.f32 %v579, %v678
        %v680 = vpop.f32.mrb[0].mxu0
        %681 = vmatprep.mubr.f32.mxu0 0.0
        %v682 = vand.u32 %v268, 4294901760
        %v683 = vsub.f32 %v268, %v682
        %v684 = vand.u32 %v683, 4294901760
        %685 = vmatmul.mubr.f32.gmra.mrb[0].mxu0 %v684
        %v686 = vpop.f32.mrb[0].mxu0
        %v687 = vadd.f32 %v586, %v686
        %v688 = vpop.f32.mrb[0].mxu0
        %689 = vdwg.mxu0
        %690 = vmatprep.subr.mxu0 0.0
        %v691 = vand.u32 %v253, 4294901760
        %v692 = vsub.f32 %v253, %v691
        %v693 = vand.u32 %v692, 4294901760
        %694 = vmatpush1.msra.mxu0 %v693
        %695 = vmatprep.subr.mxu0 0.0
        %v696 = vand.u32 %v254, 4294901760
        %v697 = vsub.f32 %v254, %v696
        %v698 = vand.u32 %v697, 4294901760
        %699 = vmatpush1.msra.mxu0 %v698
        %700 = vmatprep.subr.mxu0 0.0
        %v701 = vand.u32 %v255, 4294901760
        %v702 = vsub.f32 %v255, %v701
        %v703 = vand.u32 %v702, 4294901760
        %704 = vmatpush1.msra.mxu0 %v703
        %705 = vmatprep.subr.mxu0 0.0
        %v706 = vand.u32 %v256, 4294901760
        %v707 = vsub.f32 %v256, %v706
        %v708 = vand.u32 %v707, 4294901760
        %709 = vmatpush1.msra.mxu0 %v708
        %710 = vmatprep.subr.mxu0 0.0
        %711 = vmatpush1.msra.mxu0 0.0
        %712 = vmatprep.subr.mxu0 0.0
        %713 = vmatpush1.msra.mxu0 0.0
        %714 = vmatprep.subr.mxu0 0.0
        %715 = vmatpush1.msra.mxu0 0.0
        %716 = vmatprep.subr.mxu0 0.0
        %717 = vmatpush1.msra.mxu0 0.0
        %718 = vmatprep.subr.mxu0 0.0
        %719 = vmatpush1.msra.mxu0 0.0
        %720 = vmatprep.subr.mxu0 0.0
        %721 = vmatpush1.msra.mxu0 0.0
        %722 = vmatprep.subr.mxu0 0.0
        %723 = vmatpush1.msra.mxu0 0.0
        %724 = vmatprep.subr.mxu0 0.0
        %725 = vmatpush1.msra.mxu0 0.0
        %726 = vmatprep.subr.mxu0 0.0
        %727 = vmatpush1.msra.mxu0 0.0
        %728 = vmatprep.subr.mxu0 0.0
        %729 = vmatpush1.msra.mxu0 0.0
        %730 = vmatprep.subr.mxu0 0.0
        %731 = vmatpush1.msra.mxu0 0.0
        %732 = vmatprep.subr.mxu0 0.0
        %733 = vmatpush1.msra.mxu0 0.0
        %734 = vmatprep.subr.mxu0 0.0
        %735 = vmatpush1.msra.mxu0 0.0
        %736 = vmatprep.subr.mxu0 0.0
        %737 = vmatpush1.msra.mxu0 0.0
        %738 = vmatprep.subr.mxu0 0.0
        %739 = vmatpush1.msra.mxu0 0.0
        %740 = vmatprep.subr.mxu0 0.0
        %741 = vmatpush1.msra.mxu0 0.0
        %742 = vmatprep.subr.mxu0 0.0
        %743 = vmatpush1.msra.mxu0 0.0
        %744 = vmatprep.subr.mxu0 0.0
        %745 = vmatpush1.msra.mxu0 0.0
        %746 = vmatprep.subr.mxu0 0.0
        %747 = vmatpush1.msra.mxu0 0.0
        %748 = vmatprep.subr.mxu0 0.0
        %749 = vmatpush1.msra.mxu0 0.0
        %750 = vmatprep.subr.mxu0 0.0
        %751 = vmatpush1.msra.mxu0 0.0
        %752 = vmatprep.subr.mxu0 0.0
        %753 = vmatpush1.msra.mxu0 0.0
        %754 = vmatprep.subr.mxu0 0.0
        %755 = vmatpush1.msra.mxu0 0.0
        %756 = vmatprep.subr.mxu0 0.0
        %757 = vmatpush1.msra.mxu0 0.0
        %758 = vmatprep.subr.mxu0 0.0
        %759 = vmatpush1.msra.mxu0 0.0
        %760 = vmatprep.subr.mxu0 0.0
        %761 = vmatpush1.msra.mxu0 0.0
        %762 = vmatprep.subr.mxu0 0.0
        %763 = vmatpush1.msra.mxu0 0.0
        %764 = vmatprep.subr.mxu0 0.0
        %765 = vmatpush1.msra.mxu0 0.0
        %766 = vmatprep.mubr.f32.mxu0 0.0
        %v767 = vand.u32 %v259, 4294901760
        %768 = vmatmul.mubr.f32.gmra.mrb[0].mxu0 %v767
        %v769 = vpop.f32.mrb[0].mxu0
        %v770 = vadd.f32 %v663, %v769
        %v771 = vpop.f32.mrb[0].mxu0
        %772 = vmatprep.mubr.f32.mxu0 0.0
        %v773 = vand.u32 %v262, 4294901760
        %774 = vmatmul.mubr.f32.gmra.mrb[0].mxu0 %v773
        %v775 = vpop.f32.mrb[0].mxu0
        %v776 = vadd.f32 %v671, %v775
        %v777 = vpop.f32.mrb[0].mxu0
        %778 = vmatprep.mubr.f32.mxu0 0.0
        %v779 = vand.u32 %v265, 4294901760
        %780 = vmatmul.mubr.f32.gmra.mrb[0].mxu0 %v779
        %v781 = vpop.f32.mrb[0].mxu0
        %v782 = vadd.f32 %v679, %v781
        %v783 = vpop.f32.mrb[0].mxu0
        %784 = vmatprep.mubr.f32.mxu0 0.0
        %v785 = vand.u32 %v268, 4294901760
        %786 = vmatmul.mubr.f32.gmra.mrb[0].mxu0 %v785
        %v787 = vpop.f32.mrb[0].mxu0
        %v788 = vadd.f32 %v687, %v787
        %v789 = vpop.f32.mrb[0].mxu0
        %790 = vdwg.mxu0
        %791 = vmatprep.subr.mxu0 0.0
        %v792 = vand.u32 %v253, 4294901760
        %793 = vmatpush1.msra.mxu0 %v792
        %794 = vmatprep.subr.mxu0 0.0
        %v795 = vand.u32 %v254, 4294901760
        %796 = vmatpush1.msra.mxu0 %v795
        %797 = vmatprep.subr.mxu0 0.0
        %v798 = vand.u32 %v255, 4294901760
        %799 = vmatpush1.msra.mxu0 %v798
        %800 = vmatprep.subr.mxu0 0.0
        %v801 = vand.u32 %v256, 4294901760
        %802 = vmatpush1.msra.mxu0 %v801
        %803 = vmatprep.subr.mxu0 0.0
        %804 = vmatpush1.msra.mxu0 0.0
        %805 = vmatprep.subr.mxu0 0.0
        %806 = vmatpush1.msra.mxu0 0.0
        %807 = vmatprep.subr.mxu0 0.0
        %808 = vmatpush1.msra.mxu0 0.0
        %809 = vmatprep.subr.mxu0 0.0
        %810 = vmatpush1.msra.mxu0 0.0
        %811 = vmatprep.subr.mxu0 0.0
        %812 = vmatpush1.msra.mxu0 0.0
        %813 = vmatprep.subr.mxu0 0.0
        %814 = vmatpush1.msra.mxu0 0.0
        %815 = vmatprep.subr.mxu0 0.0
        %816 = vmatpush1.msra.mxu0 0.0
        %817 = vmatprep.subr.mxu0 0.0
        %818 = vmatpush1.msra.mxu0 0.0
        %819 = vmatprep.subr.mxu0 0.0
        %820 = vmatpush1.msra.mxu0 0.0
        %821 = vmatprep.subr.mxu0 0.0
        %822 = vmatpush1.msra.mxu0 0.0
        %823 = vmatprep.subr.mxu0 0.0
        %824 = vmatpush1.msra.mxu0 0.0
        %825 = vmatprep.subr.mxu0 0.0
        %826 = vmatpush1.msra.mxu0 0.0
        %827 = vmatprep.subr.mxu0 0.0
        %828 = vmatpush1.msra.mxu0 0.0
        %829 = vmatprep.subr.mxu0 0.0
        %830 = vmatpush1.msra.mxu0 0.0
        %831 = vmatprep.subr.mxu0 0.0
        %832 = vmatpush1.msra.mxu0 0.0
        %833 = vmatprep.subr.mxu0 0.0
        %834 = vmatpush1.msra.mxu0 0.0
        %835 = vmatprep.subr.mxu0 0.0
        %836 = vmatpush1.msra.mxu0 0.0
        %837 = vmatprep.subr.mxu0 0.0
        %838 = vmatpush1.msra.mxu0 0.0
        %839 = vmatprep.subr.mxu0 0.0
        %840 = vmatpush1.msra.mxu0 0.0
        %841 = vmatprep.subr.mxu0 0.0
        %842 = vmatpush1.msra.mxu0 0.0
        %843 = vmatprep.subr.mxu0 0.0
        %844 = vmatpush1.msra.mxu0 0.0
        %845 = vmatprep.subr.mxu0 0.0
        %846 = vmatpush1.msra.mxu0 0.0
        %847 = vmatprep.subr.mxu0 0.0
        %848 = vmatpush1.msra.mxu0 0.0
        %849 = vmatprep.subr.mxu0 0.0
        %850 = vmatpush1.msra.mxu0 0.0
        %851 = vmatprep.subr.mxu0 0.0
        %852 = vmatpush1.msra.mxu0 0.0
        %853 = vmatprep.subr.mxu0 0.0
        %854 = vmatpush1.msra.mxu0 0.0
        %855 = vmatprep.subr.mxu0 0.0
        %856 = vmatpush1.msra.mxu0 0.0
        %857 = vmatprep.subr.mxu0 0.0
        %858 = vmatpush1.msra.mxu0 0.0
        %859 = vmatprep.mubr.f32.mxu0 0.0
        %v860 = vand.u32 %v259, 4294901760
        %861 = vmatmul.mubr.f32.gmra.mrb[0].mxu0 %v860
        %v862 = vpop.f32.mrb[0].mxu0
        %v863 = vadd.f32 %v770, %v862
        %v864 = vpop.f32.mrb[0].mxu0
        %865 = vmatprep.mubr.f32.mxu0 0.0
        %v866 = vand.u32 %v262, 4294901760
        %867 = vmatmul.mubr.f32.gmra.mrb[0].mxu0 %v866
        %v868 = vpop.f32.mrb[0].mxu0
        %v869 = vadd.f32 %v776, %v868
        %v870 = vpop.f32.mrb[0].mxu0
        %871 = vmatprep.mubr.f32.mxu0 0.0
        %v872 = vand.u32 %v265, 4294901760
        %873 = vmatmul.mubr.f32.gmra.mrb[0].mxu0 %v872
        %v874 = vpop.f32.mrb[0].mxu0
        %v875 = vadd.f32 %v782, %v874
        %v876 = vpop.f32.mrb[0].mxu0
        %877 = vmatprep.mubr.f32.mxu0 0.0
        %v878 = vand.u32 %v268, 4294901760
        %879 = vmatmul.mubr.f32.gmra.mrb[0].mxu0 %v878
        %v880 = vpop.f32.mrb[0].mxu0
        %v881 = vadd.f32 %v788, %v880
        %v882 = vpop.f32.mrb[0].mxu0
        %883 = vdwg.mxu0
        %p884 = scmp.eq.s32.totalorder %s24, 0
        // Predicated region
        $region41: #{tpu_custom_call.1} parent=39 // pred_check
          %p885 = pneg %p884
        $region42: #{tpu_custom_call.1} parent=39 // pred_check_branch
          %887 = sbr.rel (%p885) target = $region44
        $region43: #{tpu_custom_call.1} parent=39 // pred_region
          %888 = vst.msk [vmem:[#allocation2] sm:$0xff] %vm257, %v863
          %889 = vst.msk [vmem:[#allocation2 + $0x8] sm:$0xff] %vm257, %v869
          %890 = vst.msk [vmem:[#allocation2 + $0x10] sm:$0xff] %vm257, %v875
          %891 = vst.msk [vmem:[#allocation2 + $0x18] sm:$0xff] %vm257, %v881
        $region44: #{tpu_custom_call.1} parent=39 // pred_fallthru
          _
        %p892 = scmp.gt.s32.totalorder %s24, 0
        // Predicated region
        $region45: #{tpu_custom_call.1} parent=39 // pred_check
          %p893 = pneg %p892
        $region46: #{tpu_custom_call.1} parent=39 // pred_check_branch
          %895 = sbr.rel (%p893) target = $region48
        $region47: #{tpu_custom_call.1} parent=39 // pred_region
          %v896 = vld [vmem:[#allocation2] sm:$0xff]
          %v897 = vld [vmem:[#allocation2 + $0x8] sm:$0xff]
          %v898 = vld [vmem:[#allocation2 + $0x10] sm:$0xff]
          %v899 = vld [vmem:[#allocation2 + $0x18] sm:$0xff]
          %v900 = vadd.f32 %v896, %v863
          %v901 = vadd.f32 %v897, %v869
          %v902 = vadd.f32 %v898, %v875
          %v903 = vadd.f32 %v899, %v881
          %904 = vst.msk [vmem:[#allocation2] sm:$0xff] %vm257, %v900
          %905 = vst.msk [vmem:[#allocation2 + $0x8] sm:$0xff] %vm257, %v901
          %906 = vst.msk [vmem:[#allocation2 + $0x10] sm:$0xff] %vm257, %v902
          %907 = vst.msk [vmem:[#allocation2 + $0x18] sm:$0xff] %vm257, %v903
        $region48: #{tpu_custom_call.1} parent=39 // pred_fallthru
          _
        // Predicated region
        $region49: #{tpu_custom_call.1} parent=39 // pred_check
          %p908 = pneg %p884
        $region50: #{tpu_custom_call.1} parent=39 // pred_check_branch
          %910 = sbr.rel (%p908) target = $region52
        $region51: #{tpu_custom_call.1} parent=39 // pred_region
          %v911 = vld [vmem:[#allocation2] sm:$0xff]
          %v912 = vld [vmem:[#allocation2 + $0x8] sm:$0xff]
          %v913 = vld [vmem:[#allocation2 + $0x10] sm:$0xff]
          %v914 = vld [vmem:[#allocation2 + $0x18] sm:$0xff]
          %v915 = vld [vmem:[%s2] sm:$0x1]
          %v917 = vlaneseq
          %v918 = vshrl.u32 %v917, 7
          %v919 = vsub.s32 0, %v918
          %v920 = vrot.slane %v915, %v919
          %v922 = vadd.f32 %v911, %v920
          %v923 = vadd.f32 %v912, %v920
          %v924 = vadd.f32 %v913, %v920
          %v925 = vadd.f32 %v914, %v920
          %v926 = vtanh.pop %v922
          %v927 = vtanh.pop %v923
          %v928 = vtanh.pop %v924
          %v929 = vtanh.pop %v925
          %v930 = vld [vmem:[%s3] sm:$0xff]
          %v931 = vld [vmem:[%s3 + $0x8] sm:$0xff]
          %v932 = vld [vmem:[%s3 + $0x10] sm:$0xff]
          %v933 = vld [vmem:[%s3 + $0x18] sm:$0xff]
          %v934 = vld [vmem:[%s4] sm:$0x1]
          %v936 = vlaneseq
          %v937 = vshrl.u32 %v936, 7
          %v938 = vsub.s32 0, %v937
          %v939 = vrot.slane %v934, %v938
          %v942 = vsel %vm257, %v926, 0
          %v945 = vsel %vm257, %v927, 0
          %v948 = vsel %vm257, %v928, 0
          %v951 = vsel %vm257, %v929, 0
          %953 = vmatprep.subr.mxu0 0.0
          %v954 = vand.u32 %v930, 4294901760
          %955 = vmatpush1.msra.mxu0 %v954
          %956 = vmatprep.subr.mxu0 0.0
          %v957 = vand.u32 %v931, 4294901760
          %958 = vmatpush1.msra.mxu0 %v957
          %959 = vmatprep.subr.mxu0 0.0
          %v960 = vand.u32 %v932, 4294901760
          %961 = vmatpush1.msra.mxu0 %v960
          %962 = vmatprep.subr.mxu0 0.0
          %v963 = vand.u32 %v933, 4294901760
          %964 = vmatpush1.msra.mxu0 %v963
          %965 = vmatprep.subr.mxu0 0.0
          %966 = vmatpush1.msra.mxu0 0.0
          %967 = vmatprep.subr.mxu0 0.0
          %968 = vmatpush1.msra.mxu0 0.0
          %969 = vmatprep.subr.mxu0 0.0
          %970 = vmatpush1.msra.mxu0 0.0
          %971 = vmatprep.subr.mxu0 0.0
          %972 = vmatpush1.msra.mxu0 0.0
          %973 = vmatprep.subr.mxu0 0.0
          %974 = vmatpush1.msra.mxu0 0.0
          %975 = vmatprep.subr.mxu0 0.0
          %976 = vmatpush1.msra.mxu0 0.0
          %977 = vmatprep.subr.mxu0 0.0
          %978 = vmatpush1.msra.mxu0 0.0
          %979 = vmatprep.subr.mxu0 0.0
          %980 = vmatpush1.msra.mxu0 0.0
          %981 = vmatprep.subr.mxu0 0.0
          %982 = vmatpush1.msra.mxu0 0.0
          %983 = vmatprep.subr.mxu0 0.0
          %984 = vmatpush1.msra.mxu0 0.0
          %985 = vmatprep.subr.mxu0 0.0
          %986 = vmatpush1.msra.mxu0 0.0
          %987 = vmatprep.subr.mxu0 0.0
          %988 = vmatpush1.msra.mxu0 0.0
          %989 = vmatprep.subr.mxu0 0.0
          %990 = vmatpush1.msra.mxu0 0.0
          %991 = vmatprep.subr.mxu0 0.0
          %992 = vmatpush1.msra.mxu0 0.0
          %993 = vmatprep.subr.mxu0 0.0
          %994 = vmatpush1.msra.mxu0 0.0
          %995 = vmatprep.subr.mxu0 0.0
          %996 = vmatpush1.msra.mxu0 0.0
          %997 = vmatprep.subr.mxu0 0.0
          %998 = vmatpush1.msra.mxu0 0.0
          %999 = vmatprep.subr.mxu0 0.0
          %1000 = vmatpush1.msra.mxu0 0.0
          %1001 = vmatprep.subr.mxu0 0.0
          %1002 = vmatpush1.msra.mxu0 0.0
          %1003 = vmatprep.subr.mxu0 0.0
          %1004 = vmatpush1.msra.mxu0 0.0
          %1005 = vmatprep.subr.mxu0 0.0
          %1006 = vmatpush1.msra.mxu0 0.0
          %1007 = vmatprep.subr.mxu0 0.0
          %1008 = vmatpush1.msra.mxu0 0.0
          %1009 = vmatprep.subr.mxu0 0.0
          %1010 = vmatpush1.msra.mxu0 0.0
          %1011 = vmatprep.subr.mxu0 0.0
          %1012 = vmatpush1.msra.mxu0 0.0
          %1013 = vmatprep.subr.mxu0 0.0
          %1014 = vmatpush1.msra.mxu0 0.0
          %1015 = vmatprep.subr.mxu0 0.0
          %1016 = vmatpush1.msra.mxu0 0.0
          %1017 = vmatprep.subr.mxu0 0.0
          %1018 = vmatpush1.msra.mxu0 0.0
          %1019 = vmatprep.subr.mxu0 0.0
          %1020 = vmatpush1.msra.mxu0 0.0
          %1021 = vmatprep.mubr.f32.mxu0 0.0
          %v1022 = vand.u32 %v942, 4294901760
          %v1023 = vsub.f32 %v942, %v1022
          %v1024 = vand.u32 %v1023, 4294901760
          %v1025 = vsub.f32 %v1023, %v1024
          %v1026 = vand.u32 %v1025, 4294901760
          %1027 = vmatmul.mubr.f32.gmra.mrb[0].mxu0 %v1026
          %v1028 = vpop.f32.mrb[0].mxu0
          %v1029 = vadd.f32 %v939, %v1028
          %v1030 = vpop.f32.mrb[0].mxu0
          %1031 = vmatprep.mubr.f32.mxu0 0.0
          %v1032 = vand.u32 %v945, 4294901760
          %v1033 = vsub.f32 %v945, %v1032
          %v1034 = vand.u32 %v1033, 4294901760
          %v1035 = vsub.f32 %v1033, %v1034
          %v1036 = vand.u32 %v1035, 4294901760
          %1037 = vmatmul.mubr.f32.gmra.mrb[0].mxu0 %v1036
          %v1038 = vpop.f32.mrb[0].mxu0
          %v1039 = vadd.f32 %v939, %v1038
          %v1040 = vpop.f32.mrb[0].mxu0
          %1041 = vmatprep.mubr.f32.mxu0 0.0
          %v1042 = vand.u32 %v948, 4294901760
          %v1043 = vsub.f32 %v948, %v1042
          %v1044 = vand.u32 %v1043, 4294901760
          %v1045 = vsub.f32 %v1043, %v1044
          %v1046 = vand.u32 %v1045, 4294901760
          %1047 = vmatmul.mubr.f32.gmra.mrb[0].mxu0 %v1046
          %v1048 = vpop.f32.mrb[0].mxu0
          %v1049 = vadd.f32 %v939, %v1048
          %v1050 = vpop.f32.mrb[0].mxu0
          %1051 = vmatprep.mubr.f32.mxu0 0.0
          %v1052 = vand.u32 %v951, 4294901760
          %v1053 = vsub.f32 %v951, %v1052
          %v1054 = vand.u32 %v1053, 4294901760
          %v1055 = vsub.f32 %v1053, %v1054
          %v1056 = vand.u32 %v1055, 4294901760
          %1057 = vmatmul.mubr.f32.gmra.mrb[0].mxu0 %v1056
          %v1058 = vpop.f32.mrb[0].mxu0
          %v1059 = vadd.f32 %v939, %v1058
          %v1060 = vpop.f32.mrb[0].mxu0
          %1061 = vdwg.mxu0
          %1062 = vmatprep.subr.mxu0 0.0
          %v1063 = vand.u32 %v930, 4294901760
          %v1064 = vsub.f32 %v930, %v1063
          %v1065 = vand.u32 %v1064, 4294901760
          %v1066 = vsub.f32 %v1064, %v1065
          %v1067 = vand.u32 %v1066, 4294901760
          %1068 = vmatpush1.msra.mxu0 %v1067
          %1069 = vmatprep.subr.mxu0 0.0
          %v1070 = vand.u32 %v931, 4294901760
          %v1071 = vsub.f32 %v931, %v1070
          %v1072 = vand.u32 %v1071, 4294901760
          %v1073 = vsub.f32 %v1071, %v1072
          %v1074 = vand.u32 %v1073, 4294901760
          %1075 = vmatpush1.msra.mxu0 %v1074
          %1076 = vmatprep.subr.mxu0 0.0
          %v1077 = vand.u32 %v932, 4294901760
          %v1078 = vsub.f32 %v932, %v1077
          %v1079 = vand.u32 %v1078, 4294901760
          %v1080 = vsub.f32 %v1078, %v1079
          %v1081 = vand.u32 %v1080, 4294901760
          %1082 = vmatpush1.msra.mxu0 %v1081
          %1083 = vmatprep.subr.mxu0 0.0
          %v1084 = vand.u32 %v933, 4294901760
          %v1085 = vsub.f32 %v933, %v1084
          %v1086 = vand.u32 %v1085, 4294901760
          %v1087 = vsub.f32 %v1085, %v1086
          %v1088 = vand.u32 %v1087, 4294901760
          %1089 = vmatpush1.msra.mxu0 %v1088
          %1090 = vmatprep.subr.mxu0 0.0
          %1091 = vmatpush1.msra.mxu0 0.0
          %1092 = vmatprep.subr.mxu0 0.0
          %1093 = vmatpush1.msra.mxu0 0.0
          %1094 = vmatprep.subr.mxu0 0.0
          %1095 = vmatpush1.msra.mxu0 0.0
          %1096 = vmatprep.subr.mxu0 0.0
          %1097 = vmatpush1.msra.mxu0 0.0
          %1098 = vmatprep.subr.mxu0 0.0
          %1099 = vmatpush1.msra.mxu0 0.0
          %1100 = vmatprep.subr.mxu0 0.0
          %1101 = vmatpush1.msra.mxu0 0.0
          %1102 = vmatprep.subr.mxu0 0.0
          %1103 = vmatpush1.msra.mxu0 0.0
          %1104 = vmatprep.subr.mxu0 0.0
          %1105 = vmatpush1.msra.mxu0 0.0
          %1106 = vmatprep.subr.mxu0 0.0
          %1107 = vmatpush1.msra.mxu0 0.0
          %1108 = vmatprep.subr.mxu0 0.0
          %1109 = vmatpush1.msra.mxu0 0.0
          %1110 = vmatprep.subr.mxu0 0.0
          %1111 = vmatpush1.msra.mxu0 0.0
          %1112 = vmatprep.subr.mxu0 0.0
          %1113 = vmatpush1.msra.mxu0 0.0
          %1114 = vmatprep.subr.mxu0 0.0
          %1115 = vmatpush1.msra.mxu0 0.0
          %1116 = vmatprep.subr.mxu0 0.0
          %1117 = vmatpush1.msra.mxu0 0.0
          %1118 = vmatprep.subr.mxu0 0.0
          %1119 = vmatpush1.msra.mxu0 0.0
          %1120 = vmatprep.subr.mxu0 0.0
          %1121 = vmatpush1.msra.mxu0 0.0
          %1122 = vmatprep.subr.mxu0 0.0
          %1123 = vmatpush1.msra.mxu0 0.0
          %1124 = vmatprep.subr.mxu0 0.0
          %1125 = vmatpush1.msra.mxu0 0.0
          %1126 = vmatprep.subr.mxu0 0.0
          %1127 = vmatpush1.msra.mxu0 0.0
          %1128 = vmatprep.subr.mxu0 0.0
          %1129 = vmatpush1.msra.mxu0 0.0
          %1130 = vmatprep.subr.mxu0 0.0
          %1131 = vmatpush1.msra.mxu0 0.0
          %1132 = vmatprep.subr.mxu0 0.0
          %1133 = vmatpush1.msra.mxu0 0.0
          %1134 = vmatprep.subr.mxu0 0.0
          %1135 = vmatpush1.msra.mxu0 0.0
          %1136 = vmatprep.subr.mxu0 0.0
          %1137 = vmatpush1.msra.mxu0 0.0
          %1138 = vmatprep.subr.mxu0 0.0
          %1139 = vmatpush1.msra.mxu0 0.0
          %1140 = vmatprep.subr.mxu0 0.0
          %1141 = vmatpush1.msra.mxu0 0.0
          %1142 = vmatprep.subr.mxu0 0.0
          %1143 = vmatpush1.msra.mxu0 0.0
          %1144 = vmatprep.subr.mxu0 0.0
          %1145 = vmatpush1.msra.mxu0 0.0
          %1146 = vmatprep.mubr.f32.mxu0 0.0
          %v1147 = vand.u32 %v942, 4294901760
          %1148 = vmatmul.mubr.f32.gmra.mrb[0].mxu0 %v1147
          %v1149 = vpop.f32.mrb[0].mxu0
          %v1150 = vadd.f32 %v1029, %v1149
          %v1151 = vpop.f32.mrb[0].mxu0
          %1152 = vmatprep.mubr.f32.mxu0 0.0
          %v1153 = vand.u32 %v945, 4294901760
          %1154 = vmatmul.mubr.f32.gmra.mrb[0].mxu0 %v1153
          %v1155 = vpop.f32.mrb[0].mxu0
          %v1156 = vadd.f32 %v1039, %v1155
          %v1157 = vpop.f32.mrb[0].mxu0
          %1158 = vmatprep.mubr.f32.mxu0 0.0
          %v1159 = vand.u32 %v948, 4294901760
          %1160 = vmatmul.mubr.f32.gmra.mrb[0].mxu0 %v1159
          %v1161 = vpop.f32.mrb[0].mxu0
          %v1162 = vadd.f32 %v1049, %v1161
          %v1163 = vpop.f32.mrb[0].mxu0
          %1164 = vmatprep.mubr.f32.mxu0 0.0
          %v1165 = vand.u32 %v951, 4294901760
          %1166 = vmatmul.mubr.f32.gmra.mrb[0].mxu0 %v1165
          %v1167 = vpop.f32.mrb[0].mxu0
          %v1168 = vadd.f32 %v1059, %v1167
          %v1169 = vpop.f32.mrb[0].mxu0
          %1170 = vdwg.mxu0
          %1171 = vmatprep.subr.mxu0 0.0
          %v1172 = vand.u32 %v930, 4294901760
          %v1173 = vsub.f32 %v930, %v1172
          %1174 = vmatpush1.msra.mxu0 %v1173
          %1175 = vmatprep.subr.mxu0 0.0
          %v1176 = vand.u32 %v931, 4294901760
          %v1177 = vsub.f32 %v931, %v1176
          %1178 = vmatpush1.msra.mxu0 %v1177
          %1179 = vmatprep.subr.mxu0 0.0
          %v1180 = vand.u32 %v932, 4294901760
          %v1181 = vsub.f32 %v932, %v1180
          %1182 = vmatpush1.msra.mxu0 %v1181
          %1183 = vmatprep.subr.mxu0 0.0
          %v1184 = vand.u32 %v933, 4294901760
          %v1185 = vsub.f32 %v933, %v1184
          %1186 = vmatpush1.msra.mxu0 %v1185
          %1187 = vmatprep.subr.mxu0 0.0
          %1188 = vmatpush1.msra.mxu0 0.0
          %1189 = vmatprep.subr.mxu0 0.0
          %1190 = vmatpush1.msra.mxu0 0.0
          %1191 = vmatprep.subr.mxu0 0.0
          %1192 = vmatpush1.msra.mxu0 0.0
          %1193 = vmatprep.subr.mxu0 0.0
          %1194 = vmatpush1.msra.mxu0 0.0
          %1195 = vmatprep.subr.mxu0 0.0
          %1196 = vmatpush1.msra.mxu0 0.0
          %1197 = vmatprep.subr.mxu0 0.0
          %1198 = vmatpush1.msra.mxu0 0.0
          %1199 = vmatprep.subr.mxu0 0.0
          %1200 = vmatpush1.msra.mxu0 0.0
          %1201 = vmatprep.subr.mxu0 0.0
          %1202 = vmatpush1.msra.mxu0 0.0
          %1203 = vmatprep.subr.mxu0 0.0
          %1204 = vmatpush1.msra.mxu0 0.0
          %1205 = vmatprep.subr.mxu0 0.0
          %1206 = vmatpush1.msra.mxu0 0.0
          %1207 = vmatprep.subr.mxu0 0.0
          %1208 = vmatpush1.msra.mxu0 0.0
          %1209 = vmatprep.subr.mxu0 0.0
          %1210 = vmatpush1.msra.mxu0 0.0
          %1211 = vmatprep.subr.mxu0 0.0
          %1212 = vmatpush1.msra.mxu0 0.0
          %1213 = vmatprep.subr.mxu0 0.0
          %1214 = vmatpush1.msra.mxu0 0.0
          %1215 = vmatprep.subr.mxu0 0.0
          %1216 = vmatpush1.msra.mxu0 0.0
          %1217 = vmatprep.subr.mxu0 0.0
          %1218 = vmatpush1.msra.mxu0 0.0
          %1219 = vmatprep.subr.mxu0 0.0
          %1220 = vmatpush1.msra.mxu0 0.0
          %1221 = vmatprep.subr.mxu0 0.0
          %1222 = vmatpush1.msra.mxu0 0.0
          %1223 = vmatprep.subr.mxu0 0.0
          %1224 = vmatpush1.msra.mxu0 0.0
          %1225 = vmatprep.subr.mxu0 0.0
          %1226 = vmatpush1.msra.mxu0 0.0
          %1227 = vmatprep.subr.mxu0 0.0
          %1228 = vmatpush1.msra.mxu0 0.0
          %1229 = vmatprep.subr.mxu0 0.0
          %1230 = vmatpush1.msra.mxu0 0.0
          %1231 = vmatprep.subr.mxu0 0.0
          %1232 = vmatpush1.msra.mxu0 0.0
          %1233 = vmatprep.subr.mxu0 0.0
          %1234 = vmatpush1.msra.mxu0 0.0
          %1235 = vmatprep.subr.mxu0 0.0
          %1236 = vmatpush1.msra.mxu0 0.0
          %1237 = vmatprep.subr.mxu0 0.0
          %1238 = vmatpush1.msra.mxu0 0.0
          %1239 = vmatprep.subr.mxu0 0.0
          %1240 = vmatpush1.msra.mxu0 0.0
          %1241 = vmatprep.subr.mxu0 0.0
          %1242 = vmatpush1.msra.mxu0 0.0
          %1243 = vmatprep.mubr.f32.mxu0 0.0
          %v1244 = vand.u32 %v942, 4294901760
          %v1245 = vsub.f32 %v942, %v1244
          %1246 = vmatmul.mubr.f32.gmra.mrb[0].mxu0 %v1245
          %v1247 = vpop.f32.mrb[0].mxu0
          %v1248 = vadd.f32 %v1150, %v1247
          %v1249 = vpop.f32.mrb[0].mxu0
          %1250 = vmatprep.mubr.f32.mxu0 0.0
          %v1251 = vand.u32 %v945, 4294901760
          %v1252 = vsub.f32 %v945, %v1251
          %1253 = vmatmul.mubr.f32.gmra.mrb[0].mxu0 %v1252
          %v1254 = vpop.f32.mrb[0].mxu0
          %v1255 = vadd.f32 %v1156, %v1254
          %v1256 = vpop.f32.mrb[0].mxu0
          %1257 = vmatprep.mubr.f32.mxu0 0.0
          %v1258 = vand.u32 %v948, 4294901760
          %v1259 = vsub.f32 %v948, %v1258
          %1260 = vmatmul.mubr.f32.gmra.mrb[0].mxu0 %v1259
          %v1261 = vpop.f32.mrb[0].mxu0
          %v1262 = vadd.f32 %v1162, %v1261
          %v1263 = vpop.f32.mrb[0].mxu0
          %1264 = vmatprep.mubr.f32.mxu0 0.0
          %v1265 = vand.u32 %v951, 4294901760
          %v1266 = vsub.f32 %v951, %v1265
          %1267 = vmatmul.mubr.f32.gmra.mrb[0].mxu0 %v1266
          %v1268 = vpop.f32.mrb[0].mxu0
          %v1269 = vadd.f32 %v1168, %v1268
          %v1270 = vpop.f32.mrb[0].mxu0
          %1271 = vdwg.mxu0
          %1272 = vmatprep.subr.mxu0 0.0
          %v1273 = vand.u32 %v930, 4294901760
          %1274 = vmatpush1.msra.mxu0 %v1273
          %1275 = vmatprep.subr.mxu0 0.0
          %v1276 = vand.u32 %v931, 4294901760
          %1277 = vmatpush1.msra.mxu0 %v1276
          %1278 = vmatprep.subr.mxu0 0.0
          %v1279 = vand.u32 %v932, 4294901760
          %1280 = vmatpush1.msra.mxu0 %v1279
          %1281 = vmatprep.subr.mxu0 0.0
          %v1282 = vand.u32 %v933, 4294901760
          %1283 = vmatpush1.msra.mxu0 %v1282
          %1284 = vmatprep.subr.mxu0 0.0
          %1285 = vmatpush1.msra.mxu0 0.0
          %1286 = vmatprep.subr.mxu0 0.0
          %1287 = vmatpush1.msra.mxu0 0.0
          %1288 = vmatprep.subr.mxu0 0.0
          %1289 = vmatpush1.msra.mxu0 0.0
          %1290 = vmatprep.subr.mxu0 0.0
          %1291 = vmatpush1.msra.mxu0 0.0
          %1292 = vmatprep.subr.mxu0 0.0
          %1293 = vmatpush1.msra.mxu0 0.0
          %1294 = vmatprep.subr.mxu0 0.0
          %1295 = vmatpush1.msra.mxu0 0.0
          %1296 = vmatprep.subr.mxu0 0.0
          %1297 = vmatpush1.msra.mxu0 0.0
          %1298 = vmatprep.subr.mxu0 0.0
          %1299 = vmatpush1.msra.mxu0 0.0
          %1300 = vmatprep.subr.mxu0 0.0
          %1301 = vmatpush1.msra.mxu0 0.0
          %1302 = vmatprep.subr.mxu0 0.0
          %1303 = vmatpush1.msra.mxu0 0.0
          %1304 = vmatprep.subr.mxu0 0.0
          %1305 = vmatpush1.msra.mxu0 0.0
          %1306 = vmatprep.subr.mxu0 0.0
          %1307 = vmatpush1.msra.mxu0 0.0
          %1308 = vmatprep.subr.mxu0 0.0
          %1309 = vmatpush1.msra.mxu0 0.0
          %1310 = vmatprep.subr.mxu0 0.0
          %1311 = vmatpush1.msra.mxu0 0.0
          %1312 = vmatprep.subr.mxu0 0.0
          %1313 = vmatpush1.msra.mxu0 0.0
          %1314 = vmatprep.subr.mxu0 0.0
          %1315 = vmatpush1.msra.mxu0 0.0
          %1316 = vmatprep.subr.mxu0 0.0
          %1317 = vmatpush1.msra.mxu0 0.0
          %1318 = vmatprep.subr.mxu0 0.0
          %1319 = vmatpush1.msra.mxu0 0.0
          %1320 = vmatprep.subr.mxu0 0.0
          %1321 = vmatpush1.msra.mxu0 0.0
          %1322 = vmatprep.subr.mxu0 0.0
          %1323 = vmatpush1.msra.mxu0 0.0
          %1324 = vmatprep.subr.mxu0 0.0
          %1325 = vmatpush1.msra.mxu0 0.0
          %1326 = vmatprep.subr.mxu0 0.0
          %1327 = vmatpush1.msra.mxu0 0.0
          %1328 = vmatprep.subr.mxu0 0.0
          %1329 = vmatpush1.msra.mxu0 0.0
          %1330 = vmatprep.subr.mxu0 0.0
          %1331 = vmatpush1.msra.mxu0 0.0
          %1332 = vmatprep.subr.mxu0 0.0
          %1333 = vmatpush1.msra.mxu0 0.0
          %1334 = vmatprep.subr.mxu0 0.0
          %1335 = vmatpush1.msra.mxu0 0.0
          %1336 = vmatprep.subr.mxu0 0.0
          %1337 = vmatpush1.msra.mxu0 0.0
          %1338 = vmatprep.subr.mxu0 0.0
          %1339 = vmatpush1.msra.mxu0 0.0
          %1340 = vmatprep.mubr.f32.mxu0 0.0
          %v1341 = vand.u32 %v942, 4294901760
          %v1342 = vsub.f32 %v942, %v1341
          %v1343 = vand.u32 %v1342, 4294901760
          %1344 = vmatmul.mubr.f32.gmra.mrb[0].mxu0 %v1343
          %v1345 = vpop.f32.mrb[0].mxu0
          %v1346 = vadd.f32 %v1248, %v1345
          %v1347 = vpop.f32.mrb[0].mxu0
          %1348 = vmatprep.mubr.f32.mxu0 0.0
          %v1349 = vand.u32 %v945, 4294901760
          %v1350 = vsub.f32 %v945, %v1349
          %v1351 = vand.u32 %v1350, 4294901760
          %1352 = vmatmul.mubr.f32.gmra.mrb[0].mxu0 %v1351
          %v1353 = vpop.f32.mrb[0].mxu0
          %v1354 = vadd.f32 %v1255, %v1353
          %v1355 = vpop.f32.mrb[0].mxu0
          %1356 = vmatprep.mubr.f32.mxu0 0.0
          %v1357 = vand.u32 %v948, 4294901760
          %v1358 = vsub.f32 %v948, %v1357
          %v1359 = vand.u32 %v1358, 4294901760
          %1360 = vmatmul.mubr.f32.gmra.mrb[0].mxu0 %v1359
          %v1361 = vpop.f32.mrb[0].mxu0
          %v1362 = vadd.f32 %v1262, %v1361
          %v1363 = vpop.f32.mrb[0].mxu0
          %1364 = vmatprep.mubr.f32.mxu0 0.0
          %v1365 = vand.u32 %v951, 4294901760
          %v1366 = vsub.f32 %v951, %v1365
          %v1367 = vand.u32 %v1366, 4294901760
          %1368 = vmatmul.mubr.f32.gmra.mrb[0].mxu0 %v1367
          %v1369 = vpop.f32.mrb[0].mxu0
          %v1370 = vadd.f32 %v1269, %v1369
          %v1371 = vpop.f32.mrb[0].mxu0
          %1372 = vdwg.mxu0
          %1373 = vmatprep.subr.mxu0 0.0
          %v1374 = vand.u32 %v930, 4294901760
          %v1375 = vsub.f32 %v930, %v1374
          %v1376 = vand.u32 %v1375, 4294901760
          %1377 = vmatpush1.msra.mxu0 %v1376
          %1378 = vmatprep.subr.mxu0 0.0
          %v1379 = vand.u32 %v931, 4294901760
          %v1380 = vsub.f32 %v931, %v1379
          %v1381 = vand.u32 %v1380, 4294901760
          %1382 = vmatpush1.msra.mxu0 %v1381
          %1383 = vmatprep.subr.mxu0 0.0
          %v1384 = vand.u32 %v932, 4294901760
          %v1385 = vsub.f32 %v932, %v1384
          %v1386 = vand.u32 %v1385, 4294901760
          %1387 = vmatpush1.msra.mxu0 %v1386
          %1388 = vmatprep.subr.mxu0 0.0
          %v1389 = vand.u32 %v933, 4294901760
          %v1390 = vsub.f32 %v933, %v1389
          %v1391 = vand.u32 %v1390, 4294901760
          %1392 = vmatpush1.msra.mxu0 %v1391
          %1393 = vmatprep.subr.mxu0 0.0
          %1394 = vmatpush1.msra.mxu0 0.0
          %1395 = vmatprep.subr.mxu0 0.0
          %1396 = vmatpush1.msra.mxu0 0.0
          %1397 = vmatprep.subr.mxu0 0.0
          %1398 = vmatpush1.msra.mxu0 0.0
          %1399 = vmatprep.subr.mxu0 0.0
          %1400 = vmatpush1.msra.mxu0 0.0
          %1401 = vmatprep.subr.mxu0 0.0
          %1402 = vmatpush1.msra.mxu0 0.0
          %1403 = vmatprep.subr.mxu0 0.0
          %1404 = vmatpush1.msra.mxu0 0.0
          %1405 = vmatprep.subr.mxu0 0.0
          %1406 = vmatpush1.msra.mxu0 0.0
          %1407 = vmatprep.subr.mxu0 0.0
          %1408 = vmatpush1.msra.mxu0 0.0
          %1409 = vmatprep.subr.mxu0 0.0
          %1410 = vmatpush1.msra.mxu0 0.0
          %1411 = vmatprep.subr.mxu0 0.0
          %1412 = vmatpush1.msra.mxu0 0.0
          %1413 = vmatprep.subr.mxu0 0.0
          %1414 = vmatpush1.msra.mxu0 0.0
          %1415 = vmatprep.subr.mxu0 0.0
          %1416 = vmatpush1.msra.mxu0 0.0
          %1417 = vmatprep.subr.mxu0 0.0
          %1418 = vmatpush1.msra.mxu0 0.0
          %1419 = vmatprep.subr.mxu0 0.0
          %1420 = vmatpush1.msra.mxu0 0.0
          %1421 = vmatprep.subr.mxu0 0.0
          %1422 = vmatpush1.msra.mxu0 0.0
          %1423 = vmatprep.subr.mxu0 0.0
          %1424 = vmatpush1.msra.mxu0 0.0
          %1425 = vmatprep.subr.mxu0 0.0
          %1426 = vmatpush1.msra.mxu0 0.0
          %1427 = vmatprep.subr.mxu0 0.0
          %1428 = vmatpush1.msra.mxu0 0.0
          %1429 = vmatprep.subr.mxu0 0.0
          %1430 = vmatpush1.msra.mxu0 0.0
          %1431 = vmatprep.subr.mxu0 0.0
          %1432 = vmatpush1.msra.mxu0 0.0
          %1433 = vmatprep.subr.mxu0 0.0
          %1434 = vmatpush1.msra.mxu0 0.0
          %1435 = vmatprep.subr.mxu0 0.0
          %1436 = vmatpush1.msra.mxu0 0.0
          %1437 = vmatprep.subr.mxu0 0.0
          %1438 = vmatpush1.msra.mxu0 0.0
          %1439 = vmatprep.subr.mxu0 0.0
          %1440 = vmatpush1.msra.mxu0 0.0
          %1441 = vmatprep.subr.mxu0 0.0
          %1442 = vmatpush1.msra.mxu0 0.0
          %1443 = vmatprep.subr.mxu0 0.0
          %1444 = vmatpush1.msra.mxu0 0.0
          %1445 = vmatprep.subr.mxu0 0.0
          %1446 = vmatpush1.msra.mxu0 0.0
          %1447 = vmatprep.subr.mxu0 0.0
          %1448 = vmatpush1.msra.mxu0 0.0
          %1449 = vmatprep.mubr.f32.mxu0 0.0
          %v1450 = vand.u32 %v942, 4294901760
          %1451 = vmatmul.mubr.f32.gmra.mrb[0].mxu0 %v1450
          %v1452 = vpop.f32.mrb[0].mxu0
          %v1453 = vadd.f32 %v1346, %v1452
          %v1454 = vpop.f32.mrb[0].mxu0
          %1455 = vmatprep.mubr.f32.mxu0 0.0
          %v1456 = vand.u32 %v945, 4294901760
          %1457 = vmatmul.mubr.f32.gmra.mrb[0].mxu0 %v1456
          %v1458 = vpop.f32.mrb[0].mxu0
          %v1459 = vadd.f32 %v1354, %v1458
          %v1460 = vpop.f32.mrb[0].mxu0
          %1461 = vmatprep.mubr.f32.mxu0 0.0
          %v1462 = vand.u32 %v948, 4294901760
          %1463 = vmatmul.mubr.f32.gmra.mrb[0].mxu0 %v1462
          %v1464 = vpop.f32.mrb[0].mxu0
          %v1465 = vadd.f32 %v1362, %v1464
          %v1466 = vpop.f32.mrb[0].mxu0
          %1467 = vmatprep.mubr.f32.mxu0 0.0
          %v1468 = vand.u32 %v951, 4294901760
          %1469 = vmatmul.mubr.f32.gmra.mrb[0].mxu0 %v1468
          %v1470 = vpop.f32.mrb[0].mxu0
          %v1471 = vadd.f32 %v1370, %v1470
          %v1472 = vpop.f32.mrb[0].mxu0
          %1473 = vdwg.mxu0
          %1474 = vmatprep.subr.mxu0 0.0
          %v1475 = vand.u32 %v930, 4294901760
          %1476 = vmatpush1.msra.mxu0 %v1475
          %1477 = vmatprep.subr.mxu0 0.0
          %v1478 = vand.u32 %v931, 4294901760
          %1479 = vmatpush1.msra.mxu0 %v1478
          %1480 = vmatprep.subr.mxu0 0.0
          %v1481 = vand.u32 %v932, 4294901760
          %1482 = vmatpush1.msra.mxu0 %v1481
          %1483 = vmatprep.subr.mxu0 0.0
          %v1484 = vand.u32 %v933, 4294901760
          %1485 = vmatpush1.msra.mxu0 %v1484
          %1486 = vmatprep.subr.mxu0 0.0
          %1487 = vmatpush1.msra.mxu0 0.0
          %1488 = vmatprep.subr.mxu0 0.0
          %1489 = vmatpush1.msra.mxu0 0.0
          %1490 = vmatprep.subr.mxu0 0.0
          %1491 = vmatpush1.msra.mxu0 0.0
          %1492 = vmatprep.subr.mxu0 0.0
          %1493 = vmatpush1.msra.mxu0 0.0
          %1494 = vmatprep.subr.mxu0 0.0
          %1495 = vmatpush1.msra.mxu0 0.0
          %1496 = vmatprep.subr.mxu0 0.0
          %1497 = vmatpush1.msra.mxu0 0.0
          %1498 = vmatprep.subr.mxu0 0.0
          %1499 = vmatpush1.msra.mxu0 0.0
          %1500 = vmatprep.subr.mxu0 0.0
          %1501 = vmatpush1.msra.mxu0 0.0
          %1502 = vmatprep.subr.mxu0 0.0
          %1503 = vmatpush1.msra.mxu0 0.0
          %1504 = vmatprep.subr.mxu0 0.0
          %1505 = vmatpush1.msra.mxu0 0.0
          %1506 = vmatprep.subr.mxu0 0.0
          %1507 = vmatpush1.msra.mxu0 0.0
          %1508 = vmatprep.subr.mxu0 0.0
          %1509 = vmatpush1.msra.mxu0 0.0
          %1510 = vmatprep.subr.mxu0 0.0
          %1511 = vmatpush1.msra.mxu0 0.0
          %1512 = vmatprep.subr.mxu0 0.0
          %1513 = vmatpush1.msra.mxu0 0.0
          %1514 = vmatprep.subr.mxu0 0.0
          %1515 = vmatpush1.msra.mxu0 0.0
          %1516 = vmatprep.subr.mxu0 0.0
          %1517 = vmatpush1.msra.mxu0 0.0
          %1518 = vmatprep.subr.mxu0 0.0
          %1519 = vmatpush1.msra.mxu0 0.0
          %1520 = vmatprep.subr.mxu0 0.0
          %1521 = vmatpush1.msra.mxu0 0.0
          %1522 = vmatprep.subr.mxu0 0.0
          %1523 = vmatpush1.msra.mxu0 0.0
          %1524 = vmatprep.subr.mxu0 0.0
          %1525 = vmatpush1.msra.mxu0 0.0
          %1526 = vmatprep.subr.mxu0 0.0
          %1527 = vmatpush1.msra.mxu0 0.0
          %1528 = vmatprep.subr.mxu0 0.0
          %1529 = vmatpush1.msra.mxu0 0.0
          %1530 = vmatprep.subr.mxu0 0.0
          %1531 = vmatpush1.msra.mxu0 0.0
          %1532 = vmatprep.subr.mxu0 0.0
          %1533 = vmatpush1.msra.mxu0 0.0
          %1534 = vmatprep.subr.mxu0 0.0
          %1535 = vmatpush1.msra.mxu0 0.0
          %1536 = vmatprep.subr.mxu0 0.0
          %1537 = vmatpush1.msra.mxu0 0.0
          %1538 = vmatprep.subr.mxu0 0.0
          %1539 = vmatpush1.msra.mxu0 0.0
          %1540 = vmatprep.subr.mxu0 0.0
          %1541 = vmatpush1.msra.mxu0 0.0
          %1542 = vmatprep.mubr.f32.mxu0 0.0
          %v1543 = vand.u32 %v942, 4294901760
          %1544 = vmatmul.mubr.f32.gmra.mrb[0].mxu0 %v1543
          %v1545 = vpop.f32.mrb[0].mxu0
          %v1546 = vadd.f32 %v1453, %v1545
          %v1547 = vpop.f32.mrb[0].mxu0
          %1548 = vmatprep.mubr.f32.mxu0 0.0
          %v1549 = vand.u32 %v945, 4294901760
          %1550 = vmatmul.mubr.f32.gmra.mrb[0].mxu0 %v1549
          %v1551 = vpop.f32.mrb[0].mxu0
          %v1552 = vadd.f32 %v1459, %v1551
          %v1553 = vpop.f32.mrb[0].mxu0
          %1554 = vmatprep.mubr.f32.mxu0 0.0
          %v1555 = vand.u32 %v948, 4294901760
          %1556 = vmatmul.mubr.f32.gmra.mrb[0].mxu0 %v1555
          %v1557 = vpop.f32.mrb[0].mxu0
          %v1558 = vadd.f32 %v1465, %v1557
          %v1559 = vpop.f32.mrb[0].mxu0
          %1560 = vmatprep.mubr.f32.mxu0 0.0
          %v1561 = vand.u32 %v951, 4294901760
          %1562 = vmatmul.mubr.f32.gmra.mrb[0].mxu0 %v1561
          %v1563 = vpop.f32.mrb[0].mxu0
          %v1564 = vadd.f32 %v1471, %v1563
          %v1565 = vpop.f32.mrb[0].mxu0
          %1566 = vdwg.mxu0
          %1567 = vst [vmem:[%s238] sm:$0xff] %v1546
          %1568 = vst [vmem:[%s238 + $0x8] sm:$0xff] %v1552
          %1569 = vst [vmem:[%s238 + $0x10] sm:$0xff] %v1558
          %1570 = vst [vmem:[%s238 + $0x18] sm:$0xff] %v1564
        $region52: #{tpu_custom_call.1} parent=39 // pred_fallthru
          _
        %s1571 = sand.u32 %s151, 1
        %s1572 = scalar_lea.sflag [#allocation4], %s1571
        %s1573 = sand.u32 %s151, 1
        %s1574 = smul.addr %s1573, 32
        %s1575 = scalar_lea.vmem [#allocation3], %s1574
        // Predicated region
        $region53: #{tpu_custom_call.1} parent=39 // pred_check
          %p1576 = pneg %p161
        $region54: #{tpu_custom_call.1} parent=39 // pred_check_branch
          %1578 = sbr.rel (%p1576) target = $region56
        $region55: #{tpu_custom_call.1} parent=39 // pred_region
          %s1579 = smul.u32 4, %s23
          %s1581 = ssub.s32 512, 512
          %1582 = vsyncadd %s1572, %s1581
          %s1583 = smul.addr %s1579, 128
          %s1584 = scalar_lea.hbm %s5, %s1583
          %s1585 = sshll.u32 %s1575, 4
          %s1586 = int_to_ptr.vmem [resolvable:$true] %s1585
          %1591 = dma.vmem_to_hbm [thread:$0]  %s1586, 512, %s1584, %s1572, 128, 128, 8
        $region56: #{tpu_custom_call.1} parent=39 // pred_fallthru
          _
      $region40: #{tpu_custom_call.1} parent=5 // pred_fallthru
        _
      %p1592 = scmp.le.s32.totalorder 2, %s14
      // Predicated region
      $region57: #{tpu_custom_call.1} parent=5 // pred_check
        %p1593 = pneg %p1592
      $region58: #{tpu_custom_call.1} parent=5 // pred_check_branch
        %1595 = sbr.rel (%p1593) target = $region60
      $region59: #{tpu_custom_call.1} parent=5 // pred_region
        %s1596 = ssub.s32 %s14, 2
        // Predicated region
        $region61: #{tpu_custom_call.1} parent=59 // pred_check
          %p1597 = pneg %p167
        $region62: #{tpu_custom_call.1} parent=59 // pred_check_branch
          %1599 = sbr.rel (%p1597) target = $region64
        $region63: #{tpu_custom_call.1} parent=59 // pred_region
          %s1600 = sand.u32 %s152, 1
          %s1601 = scalar_lea.sflag [#allocation4], %s1600
          %s1602 = sand.u32 %s152, 1
          %s1603 = smul.addr %s1602, 32
          %s1604 = scalar_lea.vmem [#allocation3], %s1603
          %1605 = dma.done %s1601, 512
        $region64: #{tpu_custom_call.1} parent=59 // pred_fallthru
          _
      $region60: #{tpu_custom_call.1} parent=5 // pred_fallthru
        _
    $region6: #{tpu_custom_call.1} parent=1 // loop_footer
      %s18 = sadd.s32 1, %s14
    $region7: #{tpu_custom_call.1} parent=1 // loop_footer_branch
      %13 = sbr.rel target = $region3
    $region8: #{tpu_custom_call.1} parent=1 // loop_exit
      _
    %1606 = vsyncpa [#allocation4], 1
    %s1607 = scalar_lea.sflag [#allocation4], 1
    %1608 = vsyncpa %s1607, 1

</llo_original>
